<compile_context>
chip_gen: v5e
topology: v5e:2x2
jax: 0.10.0
libtpu: 0.0.40
codegen_flags: <defaults>
</compile_context>

<pallas_src>
import jax
import jax.numpy as jnp
from jax.experimental import pallas as pl
from jax.experimental.pallas import tpu as pltpu

SUB, LANE = 8, 128


def _round_up(x, m):
    return ((x + m - 1) // m) * m


# ----------------------------- Pallas kernel ------------------------------ #
def char_decoder_kernel(ids_ref, h0_ref, c0_ref, g_ref, whh_ref,
                        wout_ref, bout_ref,
                        scores_ref, hout_ref, cout_ref,
                        gx_scr):
    Bp, H = h0_ref.shape
    LBp = gx_scr.shape[0]
    L = LBp // Bp
    Vp = wout_ref.shape[1]

    # --- Prologue: fused embedding + input projection ---------------------- #
    # G[v] = emb[v] @ W_ih^T + (b_ih + b_hh) was precomputed once host-side;
    # gates_x[t*Bp + b] = G[ids[t, b]] via a one-hot (L*Bp, Vp) @ (Vp, 4H)
    # MXU pass (K = Vp = 128: fully 8/128-aligned, replaces the ragged E=50
    # contraction of the previous version).
    onehot = (ids_ref[...] ==
              jax.lax.broadcasted_iota(jnp.int32, (LBp, Vp), 1)
              ).astype(jnp.float32)
    gx_scr[...] = jnp.dot(onehot, g_ref[...],
                          preferred_element_type=jnp.float32)

    # Weights / bias loaded once, reused across every unrolled step.
    whh = whh_ref[...]                                   # (H, 4H)
    wout = wout_ref[...]                                 # (H, Vp)
    bout = jnp.broadcast_to(bout_ref[...], (Bp, Vp))     # hoisted broadcast

    # sigmoid(x) = 0.5*(tanh(0.5*x)+1): one EUP push instead of exp+recip.
    def sig(v):
        return 0.5 * (jnp.tanh(0.5 * v) + 1.0)

    # --- Recurrence: h @ W_hh^T + gate math; output proj interleaved ------- #
    # TODO(synk): explicit weight-stationary MXU driving (matmul_push_rhs /
    # matmul_acc_lhs, MRB accumulation on v7x) and pl.ANY + manual DMA overlap
    # of W_out on v5e/v6e are further options; kept jnp.dot + BlockSpec DMA —
    # Mosaic can reuse the staged RHS across the unrolled steps.
    def step(t, carry):
        h, c = carry
        row = pl.multiple_of(t * Bp, Bp)
        gates = gx_scr[pl.ds(row, Bp), :] + jnp.dot(
            h, whh, preferred_element_type=jnp.float32)          # (Bp, 4H)

        i_g = sig(gates[:, 0 * H:1 * H])
        f_g = sig(gates[:, 1 * H:2 * H])
        g_g = jnp.tanh(gates[:, 2 * H:3 * H])
        o_g = sig(gates[:, 3 * H:4 * H])

        c_new = f_g * c + i_g * g_g
        h_new = o_g * jnp.tanh(c_new)

        # Output projection interleaved: step t's (Bp,H)@(H,Vp) MXU pass and
        # 128-lane-dense store overlap step t+1's EUP/VPU gate math.
        scores_ref[pl.ds(row, Bp), :] = jnp.dot(
            h_new, wout, preferred_element_type=jnp.float32) + bout
        return (h_new, c_new)

    h_fin, c_fin = jax.lax.fori_loop(
        0, L, step, (h0_ref[...], c0_ref[...]), unroll=True)

    # Final dec_hidden written exactly once.
    hout_ref[...] = h_fin
    cout_ref[...] = c_fin


# -------------------- one-time parameter preprocessing --------------------- #
def prepare_params(params):
    """Hoisted out of the forward path; call once per parameter set."""
    emb, wih, whh, bih, bhh, wout, bout = params
    V = emb.shape[0]
    H = whh.shape[1]
    Vp = max(LANE, _round_up(V, LANE))

    # Fused embedding + input projection + bias: G[v] = emb[v] @ W_ih^T + b.
    g = (jnp.dot(emb.astype(jnp.float32), wih.T.astype(jnp.float32),
                 precision=jax.lax.Precision.HIGHEST)
         + (bih + bhh).astype(jnp.float32))                       # (V, 4H)
    g = jnp.pad(g, ((0, Vp - V), (0, 0)))                         # (Vp, 4H)

    whh_t = whh.T.astype(jnp.float32)                             # (H, 4H)
    wout_t = jnp.pad(wout.T.astype(jnp.float32),
                     ((0, 0), (0, Vp - V)))                       # (H, Vp)
    bout_p = jnp.pad(bout.astype(jnp.float32), (0, Vp - V)).reshape(1, Vp)

    # TODO(synk): MXU operands could be cast to bf16 here (halves weight DMA,
    # per review) — kept f32 for tight numerical parity with the PyTorch module.
    tables = dict(g=g, whh_t=whh_t, wout_t=wout_t, bout_p=bout_p)
    return dict(tables=tables, V=V, H=H)


# ------------------------------ JAX wrapper ------------------------------- #
@jax.jit
def _char_decoder_impl(input_ids, tables, dec_hidden):
    g = tables["g"]
    whh_t = tables["whh_t"]
    wout_t = tables["wout_t"]
    bout_p = tables["bout_p"]

    L, B = input_ids.shape
    Vp, H4 = g.shape
    H = whh_t.shape[0]
    Bp = max(SUB, _round_up(B, SUB))

    # Pad batch to the 8-sublane width; padded ids select G[0] (harmless,
    # sliced off below).
    ids = jnp.pad(input_ids.astype(jnp.int32), ((0, 0), (0, Bp - B)))
    ids2d = ids.reshape(L * Bp, 1)

    if dec_hidden is None:
        h0 = jnp.zeros((B, H), jnp.float32)
        c0 = jnp.zeros((B, H), jnp.float32)
    else:
        h0, c0 = dec_hidden[0][0], dec_hidden[1][0]
    h0p = jnp.pad(h0.astype(jnp.float32), ((0, Bp - B), (0, 0)))
    c0p = jnp.pad(c0.astype(jnp.float32), ((0, Bp - B), (0, 0)))

    scores2d, h_n, c_n = pl.pallas_call(
        char_decoder_kernel,
        out_shape=(
            jax.ShapeDtypeStruct((L * Bp, Vp), jnp.float32),
            jax.ShapeDtypeStruct((Bp, H), jnp.float32),
            jax.ShapeDtypeStruct((Bp, H), jnp.float32),
        ),
        grid_spec=pltpu.PrefetchScalarGridSpec(
            num_scalar_prefetch=0,
            grid=(1,),
            in_specs=[
                pl.BlockSpec((L * Bp, 1), lambda i: (0, 0)),     # ids
                pl.BlockSpec((Bp, H), lambda i: (0, 0)),         # h0
                pl.BlockSpec((Bp, H), lambda i: (0, 0)),         # c0
                pl.BlockSpec((Vp, H4), lambda i: (0, 0)),        # fused G table
                pl.BlockSpec((H, H4), lambda i: (0, 0)),         # W_hh^T
                pl.BlockSpec((H, Vp), lambda i: (0, 0)),         # W_out^T (padded)
                pl.BlockSpec((1, Vp), lambda i: (0, 0)),         # b_out (padded)
            ],
            out_specs=[
                pl.BlockSpec((L * Bp, Vp), lambda i: (0, 0)),    # scores (padded)
                pl.BlockSpec((Bp, H), lambda i: (0, 0)),         # h_n
                pl.BlockSpec((Bp, H), lambda i: (0, 0)),         # c_n
            ],
            scratch_shapes=[
                pltpu.VMEM((L * Bp, H4), jnp.float32),           # gates_x
            ],
        ),
        compiler_params=pltpu.CompilerParams(
            dimension_semantics=("arbitrary",),
        ),
    )(ids2d, h0p, c0p, g, whh_t, wout_t, bout_p)

    scores = scores2d.reshape(L, Bp, Vp)[:, :B, :]
    return scores, h_n[None, :B, :], c_n[None, :B, :]


def char_decoder_forward(input_ids, prep, dec_hidden=None):
    """Equivalent of CharDecoder.forward.

    input_ids : (L, B) int32
    prep      : output of prepare_params(params)   (one-time preprocessing)
    returns   : scores (L, B, V) f32, (h_n, c_n) each (1, B, H) f32
    """
    scores_p, h_n, c_n = _char_decoder_impl(input_ids, prep["tables"], dec_hidden)
    return scores_p[..., :prep["V"]], (h_n, c_n)


# --------------------------- pure-JAX reference ---------------------------- #
def char_decoder_reference(input_ids, params, dec_hidden=None):
    emb, wih, whh, bih, bhh, wout, bout = params
    L, B = input_ids.shape
    H = whh.shape[1]
    x = jnp.take(emb, input_ids, axis=0).astype(jnp.float32)
    if dec_hidden is None:
        h0 = jnp.zeros((B, H), jnp.float32)
        c0 = jnp.zeros((B, H), jnp.float32)
    else:
        h0, c0 = dec_hidden[0][0], dec_hidden[1][0]

    def step(carry, x_t):
        h, c = carry
        gates = x_t @ wih.T + h @ whh.T + bih + bhh
        i, f, g, o = jnp.split(gates, 4, axis=-1)
        i, f, o = jax.nn.sigmoid(i), jax.nn.sigmoid(f), jax.nn.sigmoid(o)
        g = jnp.tanh(g)
        c = f * c + i * g
        h = o * jnp.tanh(c)
        return (h, c), h

    (hT, cT), outs = jax.lax.scan(step, (h0, c0), x)
    scores = outs @ wout.T + bout
    return scores, (hT[None], cT[None])


# ------------------------------ param init -------------------------------- #
def init_params(key, vocab_size, char_embedding_size, hidden_size, pad_idx=0):
    V, E, H = vocab_size, char_embedding_size, hidden_size
    ks = jax.random.split(key, 7)
    k_lstm = 1.0 / jnp.sqrt(H)
    k_lin = 1.0 / jnp.sqrt(H)
    emb = jax.random.normal(ks[0], (V, E), jnp.float32)
    emb = emb.at[pad_idx].set(0.0)                                  # padding_idx row
    wih = jax.random.uniform(ks[1], (4 * H, E), jnp.float32, -k_lstm, k_lstm)
    whh = jax.random.uniform(ks[2], (4 * H, H), jnp.float32, -k_lstm, k_lstm)
    bih = jax.random.uniform(ks[3], (4 * H,), jnp.float32, -k_lstm, k_lstm)
    bhh = jax.random.uniform(ks[4], (4 * H,), jnp.float32, -k_lstm, k_lstm)
    wout = jax.random.uniform(ks[5], (V, H), jnp.float32, -k_lin, k_lin)
    bout = jax.random.uniform(ks[6], (V,), jnp.float32, -k_lin, k_lin)
    return (emb, wih, whh, bih, bhh, wout, bout)


# ---------------------------------- main ----------------------------------- #
if __name__ == "__main__":
    # Small shapes consistent with the module: length=8, batch=4,
    # char_embedding_size=50 (module default), hidden_size=128, vocab=96.
    L, B, E, H, V = 8, 4, 50, 128, 96

    key = jax.random.PRNGKey(0)
    k_params, k_ids, k_h, k_c = jax.random.split(key, 4)
    params = init_params(k_params, V, E, H, pad_idx=0)
    prep = prepare_params(params)            # one-time, hoisted out of forward

    input_ids = jax.random.randint(k_ids, (L, B), 0, V, dtype=jnp.int32)
    h0 = jax.random.normal(k_h, (1, B, H), jnp.float32) * 0.1
    c0 = jax.random.normal(k_c, (1, B, H), jnp.float32) * 0.1

    # Path 1: explicit dec_hidden
    scores, (h_n, c_n) = char_decoder_forward(input_ids, prep, (h0, c0))
    jax.block_until_ready((scores, h_n, c_n))

    scores_ref, (h_ref, c_ref) = char_decoder_reference(input_ids, params, (h0, c0))
    assert scores.shape == (L, B, V) and h_n.shape == (1, B, H) and c_n.shape == (1, B, H)
    assert jnp.allclose(scores, scores_ref, atol=1e-3, rtol=1e-3)
    assert jnp.allclose(h_n, h_ref, atol=1e-3, rtol=1e-3)
    assert jnp.allclose(c_n, c_ref, atol=1e-3, rtol=1e-3)

    # Path 2: dec_hidden=None (zeros)
    scores0, (h0n, c0n) = char_decoder_forward(input_ids, prep, None)
    jax.block_until_ready((scores0, h0n, c0n))
    scores0_ref, (h0_ref, c0_ref) = char_decoder_reference(input_ids, params, None)
    assert jnp.allclose(scores0, scores0_ref, atol=1e-3, rtol=1e-3)
    assert jnp.allclose(h0n, h0_ref, atol=1e-3, rtol=1e-3)
    assert jnp.allclose(c0n, c0_ref, atol=1e-3, rtol=1e-3)

    # TODO(synk): decode_greedy's Python string assembly (id2char lookup / early
    # stop on '}') is host-side control flow and stays outside the kernel.
    print("KERNEL_OK")
</pallas_src>

<mosaic_0001>
module attributes {stable_mosaic.version = 11 : i64} {
  func.func @char_decoder_kernel(%arg0: i32, %arg1: memref<64x1xi32, #tpu.memory_space<vmem>>, %arg2: memref<8x128xf32, #tpu.memory_space<vmem>>, %arg3: memref<8x128xf32, #tpu.memory_space<vmem>>, %arg4: memref<128x512xf32, #tpu.memory_space<vmem>>, %arg5: memref<128x512xf32, #tpu.memory_space<vmem>>, %arg6: memref<128x128xf32, #tpu.memory_space<vmem>>, %arg7: memref<1x128xf32, #tpu.memory_space<vmem>>, %arg8: memref<64x128xf32, #tpu.memory_space<vmem>>, %arg9: memref<8x128xf32, #tpu.memory_space<vmem>>, %arg10: memref<8x128xf32, #tpu.memory_space<vmem>>, %arg11: memref<64x512xf32, #tpu.memory_space<vmem>>) attributes {dimension_semantics = [#tpu.dimension_semantics<arbitrary>], iteration_bounds = array<i64: 1>, scalar_prefetch = 0 : i64, scratch_operands = 1 : i64, tpu.core_type = #tpu.core_type<tc>, window_params = [{pipeline_mode = #tpu.pipeline_mode<synchronous>, transform_indices = @transform_0, window_bounds = array<i64: 64, 1>}, {pipeline_mode = #tpu.pipeline_mode<synchronous>, transform_indices = @transform_1, window_bounds = array<i64: 8, 128>}, {pipeline_mode = #tpu.pipeline_mode<synchronous>, transform_indices = @transform_2, window_bounds = array<i64: 8, 128>}, {pipeline_mode = #tpu.pipeline_mode<synchronous>, transform_indices = @transform_3, window_bounds = array<i64: 128, 512>}, {pipeline_mode = #tpu.pipeline_mode<synchronous>, transform_indices = @transform_4, window_bounds = array<i64: 128, 512>}, {pipeline_mode = #tpu.pipeline_mode<synchronous>, transform_indices = @transform_5, window_bounds = array<i64: 128, 128>}, {pipeline_mode = #tpu.pipeline_mode<synchronous>, transform_indices = @transform_6, window_bounds = array<i64: 1, 128>}, {pipeline_mode = #tpu.pipeline_mode<synchronous>, transform_indices = @transform_7, window_bounds = array<i64: 64, 128>}, {pipeline_mode = #tpu.pipeline_mode<synchronous>, transform_indices = @transform_8, window_bounds = array<i64: 8, 128>}, {pipeline_mode = #tpu.pipeline_mode<synchronous>, transform_indices = @transform_9, window_bounds = array<i64: 8, 128>}]} {
    %c0 = arith.constant 0 : index
    %c0_0 = arith.constant 0 : index
    %0 = vector.load %arg1[%c0, %c0_0] : memref<64x1xi32, #tpu.memory_space<vmem>>, vector<64x1xi32>
    %1 = tpu.iota {dimensions = array<i32: 1>} : vector<64x128xi32>
    %2 = vector.broadcast %0 : vector<64x1xi32> to vector<64x128xi32>
    %3 = arith.cmpi eq, %2, %1 : vector<64x128xi32>
    %4 = arith.extui %3 : vector<64x128xi1> to vector<64x128xi32>
    %5 = arith.sitofp %4 : vector<64x128xi32> to vector<64x128xf32>
    %c0_1 = arith.constant 0 : index
    %c0_2 = arith.constant 0 : index
    %6 = vector.load %arg4[%c0_1, %c0_2] : memref<128x512xf32, #tpu.memory_space<vmem>>, vector<128x512xf32>
    %cst = arith.constant dense<0.000000e+00> : vector<64x512xf32>
    %7 = tpu.matmul %5, %6, %cst {dimension_numbers = #tpu.dot_dimension_numbers<[1], [0], [0], [1], [0, 0, 1, 1], [], []>} : vector<64x128xf32>, vector<128x512xf32>, vector<64x512xf32> -> vector<64x512xf32>
    %c0_3 = arith.constant 0 : index
    %c0_4 = arith.constant 0 : index
    %8 = vector.load %arg11[%c0_3, %c0_4] : memref<64x512xf32, #tpu.memory_space<vmem>>, vector<64x512xf32>
    tpu.vector_store %arg11[%c0_3, %c0_4], %7 {strides = array<i32>} : memref<64x512xf32, #tpu.memory_space<vmem>>, vector<64x512xf32>,
    %c0_5 = arith.constant 0 : index
    %c0_6 = arith.constant 0 : index
    %9 = vector.load %arg5[%c0_5, %c0_6] : memref<128x512xf32, #tpu.memory_space<vmem>>, vector<128x512xf32>
    %c0_7 = arith.constant 0 : index
    %c0_8 = arith.constant 0 : index
    %10 = vector.load %arg6[%c0_7, %c0_8] : memref<128x128xf32, #tpu.memory_space<vmem>>, vector<128x128xf32>
    %c0_9 = arith.constant 0 : index
    %c0_10 = arith.constant 0 : index
    %11 = vector.load %arg7[%c0_9, %c0_10] : memref<1x128xf32, #tpu.memory_space<vmem>>, vector<1x128xf32>
    %12 = vector.shape_cast %11 : vector<1x128xf32> to vector<1x128xf32>
    %13 = vector.broadcast %12 : vector<1x128xf32> to vector<8x128xf32>
    %c0_11 = arith.constant 0 : index
    %c0_12 = arith.constant 0 : index
    %14 = vector.load %arg2[%c0_11, %c0_12] : memref<8x128xf32, #tpu.memory_space<vmem>>, vector<8x128xf32>
    %c0_13 = arith.constant 0 : index
    %c0_14 = arith.constant 0 : index
    %15 = vector.load %arg3[%c0_13, %c0_14] : memref<8x128xf32, #tpu.memory_space<vmem>>, vector<8x128xf32>
    %c0_i32 = arith.constant 0 : i32
    %c8_i32 = arith.constant 8 : i32
    %16 = arith.muli %c0_i32, %c8_i32 : i32
    %17 = tpu.assume_multiple %16, 8 : i32
    %18 = arith.index_cast %17 : i32 to index
    %c0_15 = arith.constant 0 : index
    %19 = vector.load %arg11[%18, %c0_15] : memref<64x512xf32, #tpu.memory_space<vmem>>, vector<8x512xf32>
    %cst_16 = arith.constant dense<0.000000e+00> : vector<8x512xf32>
    %20 = tpu.matmul %14, %9, %cst_16 {dimension_numbers = #tpu.dot_dimension_numbers<[1], [0], [0], [1], [0, 0, 1, 1], [], []>} : vector<8x128xf32>, vector<128x512xf32>, vector<8x512xf32> -> vector<8x512xf32>
    %21 = arith.addf %19, %20 : vector<8x512xf32>
    %22 = vector.extract_strided_slice %21 {offsets = [0, 0], sizes = [8, 128], strides = [1, 1]} : vector<8x512xf32> to vector<8x128xf32>
    %cst_17 = arith.constant 5.000000e-01 : f32
    %23 = vector.broadcast %cst_17 : f32 to vector<8x128xf32>
    %24 = arith.mulf %23, %22 : vector<8x128xf32>
    %25 = math.tanh %24 : vector<8x128xf32>
    %cst_18 = arith.constant 1.000000e+00 : f32
    %26 = vector.broadcast %cst_18 : f32 to vector<8x128xf32>
    %27 = arith.addf %25, %26 : vector<8x128xf32>
    %cst_19 = arith.constant 5.000000e-01 : f32
    %28 = vector.broadcast %cst_19 : f32 to vector<8x128xf32>
    %29 = arith.mulf %28, %27 : vector<8x128xf32>
    %30 = vector.extract_strided_slice %21 {offsets = [0, 128], sizes = [8, 128], strides = [1, 1]} : vector<8x512xf32> to vector<8x128xf32>
    %cst_20 = arith.constant 5.000000e-01 : f32
    %31 = vector.broadcast %cst_20 : f32 to vector<8x128xf32>
    %32 = arith.mulf %31, %30 : vector<8x128xf32>
    %33 = math.tanh %32 : vector<8x128xf32>
    %cst_21 = arith.constant 1.000000e+00 : f32
    %34 = vector.broadcast %cst_21 : f32 to vector<8x128xf32>
    %35 = arith.addf %33, %34 : vector<8x128xf32>
    %cst_22 = arith.constant 5.000000e-01 : f32
    %36 = vector.broadcast %cst_22 : f32 to vector<8x128xf32>
    %37 = arith.mulf %36, %35 : vector<8x128xf32>
    %38 = vector.extract_strided_slice %21 {offsets = [0, 256], sizes = [8, 128], strides = [1, 1]} : vector<8x512xf32> to vector<8x128xf32>
    %39 = math.tanh %38 : vector<8x128xf32>
    %40 = vector.extract_strided_slice %21 {offsets = [0, 384], sizes = [8, 128], strides = [1, 1]} : vector<8x512xf32> to vector<8x128xf32>
    %cst_23 = arith.constant 5.000000e-01 : f32
    %41 = vector.broadcast %cst_23 : f32 to vector<8x128xf32>
    %42 = arith.mulf %41, %40 : vector<8x128xf32>
    %43 = math.tanh %42 : vector<8x128xf32>
    %cst_24 = arith.constant 1.000000e+00 : f32
    %44 = vector.broadcast %cst_24 : f32 to vector<8x128xf32>
    %45 = arith.addf %43, %44 : vector<8x128xf32>
    %cst_25 = arith.constant 5.000000e-01 : f32
    %46 = vector.broadcast %cst_25 : f32 to vector<8x128xf32>
    %47 = arith.mulf %46, %45 : vector<8x128xf32>
    %48 = arith.mulf %37, %15 : vector<8x128xf32>
    %49 = arith.mulf %29, %39 : vector<8x128xf32>
    %50 = arith.addf %48, %49 : vector<8x128xf32>
    %51 = math.tanh %50 : vector<8x128xf32>
    %52 = arith.mulf %47, %51 : vector<8x128xf32>
    %cst_26 = arith.constant dense<0.000000e+00> : vector<8x128xf32>
    %53 = tpu.matmul %52, %10, %cst_26 {dimension_numbers = #tpu.dot_dimension_numbers<[1], [0], [0], [1], [0, 0, 1, 1], [], []>} : vector<8x128xf32>, vector<128x128xf32>, vector<8x128xf32> -> vector<8x128xf32>
    %54 = arith.addf %53, %13 : vector<8x128xf32>
    %55 = arith.index_cast %17 : i32 to index
    %c0_27 = arith.constant 0 : index
    %56 = vector.load %arg8[%55, %c0_27] : memref<64x128xf32, #tpu.memory_space<vmem>>, vector<8x128xf32>
    tpu.vector_store %arg8[%55, %c0_27], %54 {strides = array<i32>} : memref<64x128xf32, #tpu.memory_space<vmem>>, vector<8x128xf32>,
    %c1_i32 = arith.constant 1 : i32
    %c8_i32_28 = arith.constant 8 : i32
    %57 = arith.muli %c1_i32, %c8_i32_28 : i32
    %58 = tpu.assume_multiple %57, 8 : i32
    %59 = arith.index_cast %58 : i32 to index
    %c0_29 = arith.constant 0 : index
    %60 = vector.load %arg11[%59, %c0_29] : memref<64x512xf32, #tpu.memory_space<vmem>>, vector<8x512xf32>
    %cst_30 = arith.constant dense<0.000000e+00> : vector<8x512xf32>
    %61 = tpu.matmul %52, %9, %cst_30 {dimension_numbers = #tpu.dot_dimension_numbers<[1], [0], [0], [1], [0, 0, 1, 1], [], []>} : vector<8x128xf32>, vector<128x512xf32>, vector<8x512xf32> -> vector<8x512xf32>
    %62 = arith.addf %60, %61 : vector<8x512xf32>
    %63 = vector.extract_strided_slice %62 {offsets = [0, 0], sizes = [8, 128], strides = [1, 1]} : vector<8x512xf32> to vector<8x128xf32>
    %cst_31 = arith.constant 5.000000e-01 : f32
    %64 = vector.broadcast %cst_31 : f32 to vector<8x128xf32>
    %65 = arith.mulf %64, %63 : vector<8x128xf32>
    %66 = math.tanh %65 : vector<8x128xf32>
    %cst_32 = arith.constant 1.000000e+00 : f32
    %67 = vector.broadcast %cst_32 : f32 to vector<8x128xf32>
    %68 = arith.addf %66, %67 : vector<8x128xf32>
    %cst_33 = arith.constant 5.000000e-01 : f32
    %69 = vector.broadcast %cst_33 : f32 to vector<8x128xf32>
    %70 = arith.mulf %69, %68 : vector<8x128xf32>
    %71 = vector.extract_strided_slice %62 {offsets = [0, 128], sizes = [8, 128], strides = [1, 1]} : vector<8x512xf32> to vector<8x128xf32>
    %cst_34 = arith.constant 5.000000e-01 : f32
    %72 = vector.broadcast %cst_34 : f32 to vector<8x128xf32>
    %73 = arith.mulf %72, %71 : vector<8x128xf32>
    %74 = math.tanh %73 : vector<8x128xf32>
    %cst_35 = arith.constant 1.000000e+00 : f32
    %75 = vector.broadcast %cst_35 : f32 to vector<8x128xf32>
    %76 = arith.addf %74, %75 : vector<8x128xf32>
    %cst_36 = arith.constant 5.000000e-01 : f32
    %77 = vector.broadcast %cst_36 : f32 to vector<8x128xf32>
    %78 = arith.mulf %77, %76 : vector<8x128xf32>
    %79 = vector.extract_strided_slice %62 {offsets = [0, 256], sizes = [8, 128], strides = [1, 1]} : vector<8x512xf32> to vector<8x128xf32>
    %80 = math.tanh %79 : vector<8x128xf32>
    %81 = vector.extract_strided_slice %62 {offsets = [0, 384], sizes = [8, 128], strides = [1, 1]} : vector<8x512xf32> to vector<8x128xf32>
    %cst_37 = arith.constant 5.000000e-01 : f32
    %82 = vector.broadcast %cst_37 : f32 to vector<8x128xf32>
    %83 = arith.mulf %82, %81 : vector<8x128xf32>
    %84 = math.tanh %83 : vector<8x128xf32>
    %cst_38 = arith.constant 1.000000e+00 : f32
    %85 = vector.broadcast %cst_38 : f32 to vector<8x128xf32>
    %86 = arith.addf %84, %85 : vector<8x128xf32>
    %cst_39 = arith.constant 5.000000e-01 : f32
    %87 = vector.broadcast %cst_39 : f32 to vector<8x128xf32>
    %88 = arith.mulf %87, %86 : vector<8x128xf32>
    %89 = arith.mulf %78, %50 : vector<8x128xf32>
    %90 = arith.mulf %70, %80 : vector<8x128xf32>
    %91 = arith.addf %89, %90 : vector<8x128xf32>
    %92 = math.tanh %91 : vector<8x128xf32>
    %93 = arith.mulf %88, %92 : vector<8x128xf32>
    %cst_40 = arith.constant dense<0.000000e+00> : vector<8x128xf32>
    %94 = tpu.matmul %93, %10, %cst_40 {dimension_numbers = #tpu.dot_dimension_numbers<[1], [0], [0], [1], [0, 0, 1, 1], [], []>} : vector<8x128xf32>, vector<128x128xf32>, vector<8x128xf32> -> vector<8x128xf32>
    %95 = arith.addf %94, %13 : vector<8x128xf32>
    %96 = arith.index_cast %58 : i32 to index
    %c0_41 = arith.constant 0 : index
    %97 = vector.load %arg8[%96, %c0_41] : memref<64x128xf32, #tpu.memory_space<vmem>>, vector<8x128xf32>
    tpu.vector_store %arg8[%96, %c0_41], %95 {strides = array<i32>} : memref<64x128xf32, #tpu.memory_space<vmem>>, vector<8x128xf32>,
    %c2_i32 = arith.constant 2 : i32
    %c8_i32_42 = arith.constant 8 : i32
    %98 = arith.muli %c2_i32, %c8_i32_42 : i32
    %99 = tpu.assume_multiple %98, 8 : i32
    %100 = arith.index_cast %99 : i32 to index
    %c0_43 = arith.constant 0 : index
    %101 = vector.load %arg11[%100, %c0_43] : memref<64x512xf32, #tpu.memory_space<vmem>>, vector<8x512xf32>
    %cst_44 = arith.constant dense<0.000000e+00> : vector<8x512xf32>
    %102 = tpu.matmul %93, %9, %cst_44 {dimension_numbers = #tpu.dot_dimension_numbers<[1], [0], [0], [1], [0, 0, 1, 1], [], []>} : vector<8x128xf32>, vector<128x512xf32>, vector<8x512xf32> -> vector<8x512xf32>
    %103 = arith.addf %101, %102 : vector<8x512xf32>
    %104 = vector.extract_strided_slice %103 {offsets = [0, 0], sizes = [8, 128], strides = [1, 1]} : vector<8x512xf32> to vector<8x128xf32>
    %cst_45 = arith.constant 5.000000e-01 : f32
    %105 = vector.broadcast %cst_45 : f32 to vector<8x128xf32>
    %106 = arith.mulf %105, %104 : vector<8x128xf32>
    %107 = math.tanh %106 : vector<8x128xf32>
    %cst_46 = arith.constant 1.000000e+00 : f32
    %108 = vector.broadcast %cst_46 : f32 to vector<8x128xf32>
    %109 = arith.addf %107, %108 : vector<8x128xf32>
    %cst_47 = arith.constant 5.000000e-01 : f32
    %110 = vector.broadcast %cst_47 : f32 to vector<8x128xf32>
    %111 = arith.mulf %110, %109 : vector<8x128xf32>
    %112 = vector.extract_strided_slice %103 {offsets = [0, 128], sizes = [8, 128], strides = [1, 1]} : vector<8x512xf32> to vector<8x128xf32>
    %cst_48 = arith.constant 5.000000e-01 : f32
    %113 = vector.broadcast %cst_48 : f32 to vector<8x128xf32>
    %114 = arith.mulf %113, %112 : vector<8x128xf32>
    %115 = math.tanh %114 : vector<8x128xf32>
    %cst_49 = arith.constant 1.000000e+00 : f32
    %116 = vector.broadcast %cst_49 : f32 to vector<8x128xf32>
    %117 = arith.addf %115, %116 : vector<8x128xf32>
    %cst_50 = arith.constant 5.000000e-01 : f32
    %118 = vector.broadcast %cst_50 : f32 to vector<8x128xf32>
    %119 = arith.mulf %118, %117 : vector<8x128xf32>
    %120 = vector.extract_strided_slice %103 {offsets = [0, 256], sizes = [8, 128], strides = [1, 1]} : vector<8x512xf32> to vector<8x128xf32>
    %121 = math.tanh %120 : vector<8x128xf32>
    %122 = vector.extract_strided_slice %103 {offsets = [0, 384], sizes = [8, 128], strides = [1, 1]} : vector<8x512xf32> to vector<8x128xf32>
    %cst_51 = arith.constant 5.000000e-01 : f32
    %123 = vector.broadcast %cst_51 : f32 to vector<8x128xf32>
    %124 = arith.mulf %123, %122 : vector<8x128xf32>
    %125 = math.tanh %124 : vector<8x128xf32>
    %cst_52 = arith.constant 1.000000e+00 : f32
    %126 = vector.broadcast %cst_52 : f32 to vector<8x128xf32>
    %127 = arith.addf %125, %126 : vector<8x128xf32>
    %cst_53 = arith.constant 5.000000e-01 : f32
    %128 = vector.broadcast %cst_53 : f32 to vector<8x128xf32>
    %129 = arith.mulf %128, %127 : vector<8x128xf32>
    %130 = arith.mulf %119, %91 : vector<8x128xf32>
    %131 = arith.mulf %111, %121 : vector<8x128xf32>
    %132 = arith.addf %130, %131 : vector<8x128xf32>
    %133 = math.tanh %132 : vector<8x128xf32>
    %134 = arith.mulf %129, %133 : vector<8x128xf32>
    %cst_54 = arith.constant dense<0.000000e+00> : vector<8x128xf32>
    %135 = tpu.matmul %134, %10, %cst_54 {dimension_numbers = #tpu.dot_dimension_numbers<[1], [0], [0], [1], [0, 0, 1, 1], [], []>} : vector<8x128xf32>, vector<128x128xf32>, vector<8x128xf32> -> vector<8x128xf32>
    %136 = arith.addf %135, %13 : vector<8x128xf32>
    %137 = arith.index_cast %99 : i32 to index
    %c0_55 = arith.constant 0 : index
    %138 = vector.load %arg8[%137, %c0_55] : memref<64x128xf32, #tpu.memory_space<vmem>>, vector<8x128xf32>
    tpu.vector_store %arg8[%137, %c0_55], %136 {strides = array<i32>} : memref<64x128xf32, #tpu.memory_space<vmem>>, vector<8x128xf32>,
    %c3_i32 = arith.constant 3 : i32
    %c8_i32_56 = arith.constant 8 : i32
    %139 = arith.muli %c3_i32, %c8_i32_56 : i32
    %140 = tpu.assume_multiple %139, 8 : i32
    %141 = arith.index_cast %140 : i32 to index
    %c0_57 = arith.constant 0 : index
    %142 = vector.load %arg11[%141, %c0_57] : memref<64x512xf32, #tpu.memory_space<vmem>>, vector<8x512xf32>
    %cst_58 = arith.constant dense<0.000000e+00> : vector<8x512xf32>
    %143 = tpu.matmul %134, %9, %cst_58 {dimension_numbers = #tpu.dot_dimension_numbers<[1], [0], [0], [1], [0, 0, 1, 1], [], []>} : vector<8x128xf32>, vector<128x512xf32>, vector<8x512xf32> -> vector<8x512xf32>
    %144 = arith.addf %142, %143 : vector<8x512xf32>
    %145 = vector.extract_strided_slice %144 {offsets = [0, 0], sizes = [8, 128], strides = [1, 1]} : vector<8x512xf32> to vector<8x128xf32>
    %cst_59 = arith.constant 5.000000e-01 : f32
    %146 = vector.broadcast %cst_59 : f32 to vector<8x128xf32>
    %147 = arith.mulf %146, %145 : vector<8x128xf32>
    %148 = math.tanh %147 : vector<8x128xf32>
    %cst_60 = arith.constant 1.000000e+00 : f32
    %149 = vector.broadcast %cst_60 : f32 to vector<8x128xf32>
    %150 = arith.addf %148, %149 : vector<8x128xf32>
    %cst_61 = arith.constant 5.000000e-01 : f32
    %151 = vector.broadcast %cst_61 : f32 to vector<8x128xf32>
    %152 = arith.mulf %151, %150 : vector<8x128xf32>
    %153 = vector.extract_strided_slice %144 {offsets = [0, 128], sizes = [8, 128], strides = [1, 1]} : vector<8x512xf32> to vector<8x128xf32>
    %cst_62 = arith.constant 5.000000e-01 : f32
    %154 = vector.broadcast %cst_62 : f32 to vector<8x128xf32>
    %155 = arith.mulf %154, %153 : vector<8x128xf32>
    %156 = math.tanh %155 : vector<8x128xf32>
    %cst_63 = arith.constant 1.000000e+00 : f32
    %157 = vector.broadcast %cst_63 : f32 to vector<8x128xf32>
    %158 = arith.addf %156, %157 : vector<8x128xf32>
    %cst_64 = arith.constant 5.000000e-01 : f32
    %159 = vector.broadcast %cst_64 : f32 to vector<8x128xf32>
    %160 = arith.mulf %159, %158 : vector<8x128xf32>
    %161 = vector.extract_strided_slice %144 {offsets = [0, 256], sizes = [8, 128], strides = [1, 1]} : vector<8x512xf32> to vector<8x128xf32>
    %162 = math.tanh %161 : vector<8x128xf32>
    %163 = vector.extract_strided_slice %144 {offsets = [0, 384], sizes = [8, 128], strides = [1, 1]} : vector<8x512xf32> to vector<8x128xf32>
    %cst_65 = arith.constant 5.000000e-01 : f32
    %164 = vector.broadcast %cst_65 : f32 to vector<8x128xf32>
    %165 = arith.mulf %164, %163 : vector<8x128xf32>
    %166 = math.tanh %165 : vector<8x128xf32>
    %cst_66 = arith.constant 1.000000e+00 : f32
    %167 = vector.broadcast %cst_66 : f32 to vector<8x128xf32>
    %168 = arith.addf %166, %167 : vector<8x128xf32>
    %cst_67 = arith.constant 5.000000e-01 : f32
    %169 = vector.broadcast %cst_67 : f32 to vector<8x128xf32>
    %170 = arith.mulf %169, %168 : vector<8x128xf32>
    %171 = arith.mulf %160, %132 : vector<8x128xf32>
    %172 = arith.mulf %152, %162 : vector<8x128xf32>
    %173 = arith.addf %171, %172 : vector<8x128xf32>
    %174 = math.tanh %173 : vector<8x128xf32>
    %175 = arith.mulf %170, %174 : vector<8x128xf32>
    %cst_68 = arith.constant dense<0.000000e+00> : vector<8x128xf32>
    %176 = tpu.matmul %175, %10, %cst_68 {dimension_numbers = #tpu.dot_dimension_numbers<[1], [0], [0], [1], [0, 0, 1, 1], [], []>} : vector<8x128xf32>, vector<128x128xf32>, vector<8x128xf32> -> vector<8x128xf32>
    %177 = arith.addf %176, %13 : vector<8x128xf32>
    %178 = arith.index_cast %140 : i32 to index
    %c0_69 = arith.constant 0 : index
    %179 = vector.load %arg8[%178, %c0_69] : memref<64x128xf32, #tpu.memory_space<vmem>>, vector<8x128xf32>
    tpu.vector_store %arg8[%178, %c0_69], %177 {strides = array<i32>} : memref<64x128xf32, #tpu.memory_space<vmem>>, vector<8x128xf32>,
    %c4_i32 = arith.constant 4 : i32
    %c8_i32_70 = arith.constant 8 : i32
    %180 = arith.muli %c4_i32, %c8_i32_70 : i32
    %181 = tpu.assume_multiple %180, 8 : i32
    %182 = arith.index_cast %181 : i32 to index
    %c0_71 = arith.constant 0 : index
    %183 = vector.load %arg11[%182, %c0_71] : memref<64x512xf32, #tpu.memory_space<vmem>>, vector<8x512xf32>
    %cst_72 = arith.constant dense<0.000000e+00> : vector<8x512xf32>
    %184 = tpu.matmul %175, %9, %cst_72 {dimension_numbers = #tpu.dot_dimension_numbers<[1], [0], [0], [1], [0, 0, 1, 1], [], []>} : vector<8x128xf32>, vector<128x512xf32>, vector<8x512xf32> -> vector<8x512xf32>
    %185 = arith.addf %183, %184 : vector<8x512xf32>
    %186 = vector.extract_strided_slice %185 {offsets = [0, 0], sizes = [8, 128], strides = [1, 1]} : vector<8x512xf32> to vector<8x128xf32>
    %cst_73 = arith.constant 5.000000e-01 : f32
    %187 = vector.broadcast %cst_73 : f32 to vector<8x128xf32>
    %188 = arith.mulf %187, %186 : vector<8x128xf32>
    %189 = math.tanh %188 : vector<8x128xf32>
    %cst_74 = arith.constant 1.000000e+00 : f32
    %190 = vector.broadcast %cst_74 : f32 to vector<8x128xf32>
    %191 = arith.addf %189, %190 : vector<8x128xf32>
    %cst_75 = arith.constant 5.000000e-01 : f32
    %192 = vector.broadcast %cst_75 : f32 to vector<8x128xf32>
    %193 = arith.mulf %192, %191 : vector<8x128xf32>
    %194 = vector.extract_strided_slice %185 {offsets = [0, 128], sizes = [8, 128], strides = [1, 1]} : vector<8x512xf32> to vector<8x128xf32>
    %cst_76 = arith.constant 5.000000e-01 : f32
    %195 = vector.broadcast %cst_76 : f32 to vector<8x128xf32>
    %196 = arith.mulf %195, %194 : vector<8x128xf32>
    %197 = math.tanh %196 : vector<8x128xf32>
    %cst_77 = arith.constant 1.000000e+00 : f32
    %198 = vector.broadcast %cst_77 : f32 to vector<8x128xf32>
    %199 = arith.addf %197, %198 : vector<8x128xf32>
    %cst_78 = arith.constant 5.000000e-01 : f32
    %200 = vector.broadcast %cst_78 : f32 to vector<8x128xf32>
    %201 = arith.mulf %200, %199 : vector<8x128xf32>
    %202 = vector.extract_strided_slice %185 {offsets = [0, 256], sizes = [8, 128], strides = [1, 1]} : vector<8x512xf32> to vector<8x128xf32>
    %203 = math.tanh %202 : vector<8x128xf32>
    %204 = vector.extract_strided_slice %185 {offsets = [0, 384], sizes = [8, 128], strides = [1, 1]} : vector<8x512xf32> to vector<8x128xf32>
    %cst_79 = arith.constant 5.000000e-01 : f32
    %205 = vector.broadcast %cst_79 : f32 to vector<8x128xf32>
    %206 = arith.mulf %205, %204 : vector<8x128xf32>
    %207 = math.tanh %206 : vector<8x128xf32>
    %cst_80 = arith.constant 1.000000e+00 : f32
    %208 = vector.broadcast %cst_80 : f32 to vector<8x128xf32>
    %209 = arith.addf %207, %208 : vector<8x128xf32>
    %cst_81 = arith.constant 5.000000e-01 : f32
    %210 = vector.broadcast %cst_81 : f32 to vector<8x128xf32>
    %211 = arith.mulf %210, %209 : vector<8x128xf32>
    %212 = arith.mulf %201, %173 : vector<8x128xf32>
    %213 = arith.mulf %193, %203 : vector<8x128xf32>
    %214 = arith.addf %212, %213 : vector<8x128xf32>
    %215 = math.tanh %214 : vector<8x128xf32>
    %216 = arith.mulf %211, %215 : vector<8x128xf32>
    %cst_82 = arith.constant dense<0.000000e+00> : vector<8x128xf32>
    %217 = tpu.matmul %216, %10, %cst_82 {dimension_numbers = #tpu.dot_dimension_numbers<[1], [0], [0], [1], [0, 0, 1, 1], [], []>} : vector<8x128xf32>, vector<128x128xf32>, vector<8x128xf32> -> vector<8x128xf32>
    %218 = arith.addf %217, %13 : vector<8x128xf32>
    %219 = arith.index_cast %181 : i32 to index
    %c0_83 = arith.constant 0 : index
    %220 = vector.load %arg8[%219, %c0_83] : memref<64x128xf32, #tpu.memory_space<vmem>>, vector<8x128xf32>
    tpu.vector_store %arg8[%219, %c0_83], %218 {strides = array<i32>} : memref<64x128xf32, #tpu.memory_space<vmem>>, vector<8x128xf32>,
    %c5_i32 = arith.constant 5 : i32
    %c8_i32_84 = arith.constant 8 : i32
    %221 = arith.muli %c5_i32, %c8_i32_84 : i32
    %222 = tpu.assume_multiple %221, 8 : i32
    %223 = arith.index_cast %222 : i32 to index
    %c0_85 = arith.constant 0 : index
    %224 = vector.load %arg11[%223, %c0_85] : memref<64x512xf32, #tpu.memory_space<vmem>>, vector<8x512xf32>
    %cst_86 = arith.constant dense<0.000000e+00> : vector<8x512xf32>
    %225 = tpu.matmul %216, %9, %cst_86 {dimension_numbers = #tpu.dot_dimension_numbers<[1], [0], [0], [1], [0, 0, 1, 1], [], []>} : vector<8x128xf32>, vector<128x512xf32>, vector<8x512xf32> -> vector<8x512xf32>
    %226 = arith.addf %224, %225 : vector<8x512xf32>
    %227 = vector.extract_strided_slice %226 {offsets = [0, 0], sizes = [8, 128], strides = [1, 1]} : vector<8x512xf32> to vector<8x128xf32>
    %cst_87 = arith.constant 5.000000e-01 : f32
    %228 = vector.broadcast %cst_87 : f32 to vector<8x128xf32>
    %229 = arith.mulf %228, %227 : vector<8x128xf32>
    %230 = math.tanh %229 : vector<8x128xf32>
    %cst_88 = arith.constant 1.000000e+00 : f32
    %231 = vector.broadcast %cst_88 : f32 to vector<8x128xf32>
    %232 = arith.addf %230, %231 : vector<8x128xf32>
    %cst_89 = arith.constant 5.000000e-01 : f32
    %233 = vector.broadcast %cst_89 : f32 to vector<8x128xf32>
    %234 = arith.mulf %233, %232 : vector<8x128xf32>
    %235 = vector.extract_strided_slice %226 {offsets = [0, 128], sizes = [8, 128], strides = [1, 1]} : vector<8x512xf32> to vector<8x128xf32>
    %cst_90 = arith.constant 5.000000e-01 : f32
    %236 = vector.broadcast %cst_90 : f32 to vector<8x128xf32>
    %237 = arith.mulf %236, %235 : vector<8x128xf32>
    %238 = math.tanh %237 : vector<8x128xf32>
    %cst_91 = arith.constant 1.000000e+00 : f32
    %239 = vector.broadcast %cst_91 : f32 to vector<8x128xf32>
    %240 = arith.addf %238, %239 : vector<8x128xf32>
    %cst_92 = arith.constant 5.000000e-01 : f32
    %241 = vector.broadcast %cst_92 : f32 to vector<8x128xf32>
    %242 = arith.mulf %241, %240 : vector<8x128xf32>
    %243 = vector.extract_strided_slice %226 {offsets = [0, 256], sizes = [8, 128], strides = [1, 1]} : vector<8x512xf32> to vector<8x128xf32>
    %244 = math.tanh %243 : vector<8x128xf32>
    %245 = vector.extract_strided_slice %226 {offsets = [0, 384], sizes = [8, 128], strides = [1, 1]} : vector<8x512xf32> to vector<8x128xf32>
    %cst_93 = arith.constant 5.000000e-01 : f32
    %246 = vector.broadcast %cst_93 : f32 to vector<8x128xf32>
    %247 = arith.mulf %246, %245 : vector<8x128xf32>
    %248 = math.tanh %247 : vector<8x128xf32>
    %cst_94 = arith.constant 1.000000e+00 : f32
    %249 = vector.broadcast %cst_94 : f32 to vector<8x128xf32>
    %250 = arith.addf %248, %249 : vector<8x128xf32>
    %cst_95 = arith.constant 5.000000e-01 : f32
    %251 = vector.broadcast %cst_95 : f32 to vector<8x128xf32>
    %252 = arith.mulf %251, %250 : vector<8x128xf32>
    %253 = arith.mulf %242, %214 : vector<8x128xf32>
    %254 = arith.mulf %234, %244 : vector<8x128xf32>
    %255 = arith.addf %253, %254 : vector<8x128xf32>
    %256 = math.tanh %255 : vector<8x128xf32>
    %257 = arith.mulf %252, %256 : vector<8x128xf32>
    %cst_96 = arith.constant dense<0.000000e+00> : vector<8x128xf32>
    %258 = tpu.matmul %257, %10, %cst_96 {dimension_numbers = #tpu.dot_dimension_numbers<[1], [0], [0], [1], [0, 0, 1, 1], [], []>} : vector<8x128xf32>, vector<128x128xf32>, vector<8x128xf32> -> vector<8x128xf32>
    %259 = arith.addf %258, %13 : vector<8x128xf32>
    %260 = arith.index_cast %222 : i32 to index
    %c0_97 = arith.constant 0 : index
    %261 = vector.load %arg8[%260, %c0_97] : memref<64x128xf32, #tpu.memory_space<vmem>>, vector<8x128xf32>
    tpu.vector_store %arg8[%260, %c0_97], %259 {strides = array<i32>} : memref<64x128xf32, #tpu.memory_space<vmem>>, vector<8x128xf32>,
    %c6_i32 = arith.constant 6 : i32
    %c8_i32_98 = arith.constant 8 : i32
    %262 = arith.muli %c6_i32, %c8_i32_98 : i32
    %263 = tpu.assume_multiple %262, 8 : i32
    %264 = arith.index_cast %263 : i32 to index
    %c0_99 = arith.constant 0 : index
    %265 = vector.load %arg11[%264, %c0_99] : memref<64x512xf32, #tpu.memory_space<vmem>>, vector<8x512xf32>
    %cst_100 = arith.constant dense<0.000000e+00> : vector<8x512xf32>
    %266 = tpu.matmul %257, %9, %cst_100 {dimension_numbers = #tpu.dot_dimension_numbers<[1], [0], [0], [1], [0, 0, 1, 1], [], []>} : vector<8x128xf32>, vector<128x512xf32>, vector<8x512xf32> -> vector<8x512xf32>
    %267 = arith.addf %265, %266 : vector<8x512xf32>
    %268 = vector.extract_strided_slice %267 {offsets = [0, 0], sizes = [8, 128], strides = [1, 1]} : vector<8x512xf32> to vector<8x128xf32>
    %cst_101 = arith.constant 5.000000e-01 : f32
    %269 = vector.broadcast %cst_101 : f32 to vector<8x128xf32>
    %270 = arith.mulf %269, %268 : vector<8x128xf32>
    %271 = math.tanh %270 : vector<8x128xf32>
    %cst_102 = arith.constant 1.000000e+00 : f32
    %272 = vector.broadcast %cst_102 : f32 to vector<8x128xf32>
    %273 = arith.addf %271, %272 : vector<8x128xf32>
    %cst_103 = arith.constant 5.000000e-01 : f32
    %274 = vector.broadcast %cst_103 : f32 to vector<8x128xf32>
    %275 = arith.mulf %274, %273 : vector<8x128xf32>
    %276 = vector.extract_strided_slice %267 {offsets = [0, 128], sizes = [8, 128], strides = [1, 1]} : vector<8x512xf32> to vector<8x128xf32>
    %cst_104 = arith.constant 5.000000e-01 : f32
    %277 = vector.broadcast %cst_104 : f32 to vector<8x128xf32>
    %278 = arith.mulf %277, %276 : vector<8x128xf32>
    %279 = math.tanh %278 : vector<8x128xf32>
    %cst_105 = arith.constant 1.000000e+00 : f32
    %280 = vector.broadcast %cst_105 : f32 to vector<8x128xf32>
    %281 = arith.addf %279, %280 : vector<8x128xf32>
    %cst_106 = arith.constant 5.000000e-01 : f32
    %282 = vector.broadcast %cst_106 : f32 to vector<8x128xf32>
    %283 = arith.mulf %282, %281 : vector<8x128xf32>
    %284 = vector.extract_strided_slice %267 {offsets = [0, 256], sizes = [8, 128], strides = [1, 1]} : vector<8x512xf32> to vector<8x128xf32>
    %285 = math.tanh %284 : vector<8x128xf32>
    %286 = vector.extract_strided_slice %267 {offsets = [0, 384], sizes = [8, 128], strides = [1, 1]} : vector<8x512xf32> to vector<8x128xf32>
    %cst_107 = arith.constant 5.000000e-01 : f32
    %287 = vector.broadcast %cst_107 : f32 to vector<8x128xf32>
    %288 = arith.mulf %287, %286 : vector<8x128xf32>
    %289 = math.tanh %288 : vector<8x128xf32>
    %cst_108 = arith.constant 1.000000e+00 : f32
    %290 = vector.broadcast %cst_108 : f32 to vector<8x128xf32>
    %291 = arith.addf %289, %290 : vector<8x128xf32>
    %cst_109 = arith.constant 5.000000e-01 : f32
    %292 = vector.broadcast %cst_109 : f32 to vector<8x128xf32>
    %293 = arith.mulf %292, %291 : vector<8x128xf32>
    %294 = arith.mulf %283, %255 : vector<8x128xf32>
    %295 = arith.mulf %275, %285 : vector<8x128xf32>
    %296 = arith.addf %294, %295 : vector<8x128xf32>
    %297 = math.tanh %296 : vector<8x128xf32>
    %298 = arith.mulf %293, %297 : vector<8x128xf32>
    %cst_110 = arith.constant dense<0.000000e+00> : vector<8x128xf32>
    %299 = tpu.matmul %298, %10, %cst_110 {dimension_numbers = #tpu.dot_dimension_numbers<[1], [0], [0], [1], [0, 0, 1, 1], [], []>} : vector<8x128xf32>, vector<128x128xf32>, vector<8x128xf32> -> vector<8x128xf32>
    %300 = arith.addf %299, %13 : vector<8x128xf32>
    %301 = arith.index_cast %263 : i32 to index
    %c0_111 = arith.constant 0 : index
    %302 = vector.load %arg8[%301, %c0_111] : memref<64x128xf32, #tpu.memory_space<vmem>>, vector<8x128xf32>
    tpu.vector_store %arg8[%301, %c0_111], %300 {strides = array<i32>} : memref<64x128xf32, #tpu.memory_space<vmem>>, vector<8x128xf32>,
    %c7_i32 = arith.constant 7 : i32
    %c8_i32_112 = arith.constant 8 : i32
    %303 = arith.muli %c7_i32, %c8_i32_112 : i32
    %304 = tpu.assume_multiple %303, 8 : i32
    %305 = arith.index_cast %304 : i32 to index
    %c0_113 = arith.constant 0 : index
    %306 = vector.load %arg11[%305, %c0_113] : memref<64x512xf32, #tpu.memory_space<vmem>>, vector<8x512xf32>
    %cst_114 = arith.constant dense<0.000000e+00> : vector<8x512xf32>
    %307 = tpu.matmul %298, %9, %cst_114 {dimension_numbers = #tpu.dot_dimension_numbers<[1], [0], [0], [1], [0, 0, 1, 1], [], []>} : vector<8x128xf32>, vector<128x512xf32>, vector<8x512xf32> -> vector<8x512xf32>
    %308 = arith.addf %306, %307 : vector<8x512xf32>
    %309 = vector.extract_strided_slice %308 {offsets = [0, 0], sizes = [8, 128], strides = [1, 1]} : vector<8x512xf32> to vector<8x128xf32>
    %cst_115 = arith.constant 5.000000e-01 : f32
    %310 = vector.broadcast %cst_115 : f32 to vector<8x128xf32>
    %311 = arith.mulf %310, %309 : vector<8x128xf32>
    %312 = math.tanh %311 : vector<8x128xf32>
    %cst_116 = arith.constant 1.000000e+00 : f32
    %313 = vector.broadcast %cst_116 : f32 to vector<8x128xf32>
    %314 = arith.addf %312, %313 : vector<8x128xf32>
    %cst_117 = arith.constant 5.000000e-01 : f32
    %315 = vector.broadcast %cst_117 : f32 to vector<8x128xf32>
    %316 = arith.mulf %315, %314 : vector<8x128xf32>
    %317 = vector.extract_strided_slice %308 {offsets = [0, 128], sizes = [8, 128], strides = [1, 1]} : vector<8x512xf32> to vector<8x128xf32>
    %cst_118 = arith.constant 5.000000e-01 : f32
    %318 = vector.broadcast %cst_118 : f32 to vector<8x128xf32>
    %319 = arith.mulf %318, %317 : vector<8x128xf32>
    %320 = math.tanh %319 : vector<8x128xf32>
    %cst_119 = arith.constant 1.000000e+00 : f32
    %321 = vector.broadcast %cst_119 : f32 to vector<8x128xf32>
    %322 = arith.addf %320, %321 : vector<8x128xf32>
    %cst_120 = arith.constant 5.000000e-01 : f32
    %323 = vector.broadcast %cst_120 : f32 to vector<8x128xf32>
    %324 = arith.mulf %323, %322 : vector<8x128xf32>
    %325 = vector.extract_strided_slice %308 {offsets = [0, 256], sizes = [8, 128], strides = [1, 1]} : vector<8x512xf32> to vector<8x128xf32>
    %326 = math.tanh %325 : vector<8x128xf32>
    %327 = vector.extract_strided_slice %308 {offsets = [0, 384], sizes = [8, 128], strides = [1, 1]} : vector<8x512xf32> to vector<8x128xf32>
    %cst_121 = arith.constant 5.000000e-01 : f32
    %328 = vector.broadcast %cst_121 : f32 to vector<8x128xf32>
    %329 = arith.mulf %328, %327 : vector<8x128xf32>
    %330 = math.tanh %329 : vector<8x128xf32>
    %cst_122 = arith.constant 1.000000e+00 : f32
    %331 = vector.broadcast %cst_122 : f32 to vector<8x128xf32>
    %332 = arith.addf %330, %331 : vector<8x128xf32>
    %cst_123 = arith.constant 5.000000e-01 : f32
    %333 = vector.broadcast %cst_123 : f32 to vector<8x128xf32>
    %334 = arith.mulf %333, %332 : vector<8x128xf32>
    %335 = arith.mulf %324, %296 : vector<8x128xf32>
    %336 = arith.mulf %316, %326 : vector<8x128xf32>
    %337 = arith.addf %335, %336 : vector<8x128xf32>
    %338 = math.tanh %337 : vector<8x128xf32>
    %339 = arith.mulf %334, %338 : vector<8x128xf32>
    %cst_124 = arith.constant dense<0.000000e+00> : vector<8x128xf32>
    %340 = tpu.matmul %339, %10, %cst_124 {dimension_numbers = #tpu.dot_dimension_numbers<[1], [0], [0], [1], [0, 0, 1, 1], [], []>} : vector<8x128xf32>, vector<128x128xf32>, vector<8x128xf32> -> vector<8x128xf32>
    %341 = arith.addf %340, %13 : vector<8x128xf32>
    %342 = arith.index_cast %304 : i32 to index
    %c0_125 = arith.constant 0 : index
    %343 = vector.load %arg8[%342, %c0_125] : memref<64x128xf32, #tpu.memory_space<vmem>>, vector<8x128xf32>
    tpu.vector_store %arg8[%342, %c0_125], %341 {strides = array<i32>} : memref<64x128xf32, #tpu.memory_space<vmem>>, vector<8x128xf32>,
    %c8_i32_126 = arith.constant 8 : i32
    %c0_127 = arith.constant 0 : index
    %c0_128 = arith.constant 0 : index
    %344 = vector.load %arg9[%c0_127, %c0_128] : memref<8x128xf32, #tpu.memory_space<vmem>>, vector<8x128xf32>
    tpu.vector_store %arg9[%c0_127, %c0_128], %339 {strides = array<i32>} : memref<8x128xf32, #tpu.memory_space<vmem>>, vector<8x128xf32>,
    %c0_129 = arith.constant 0 : index
    %c0_130 = arith.constant 0 : index
    %345 = vector.load %arg10[%c0_129, %c0_130] : memref<8x128xf32, #tpu.memory_space<vmem>>, vector<8x128xf32>
    tpu.vector_store %arg10[%c0_129, %c0_130], %337 {strides = array<i32>} : memref<8x128xf32, #tpu.memory_space<vmem>>, vector<8x128xf32>,
    return
  }
  func.func @transform_0(%arg0: i32) -> (i32, i32) {
    %c0_i32 = arith.constant 0 : i32
    %c0_i32_0 = arith.constant 0 : i32
    %c0_i32_1 = arith.constant 0 : i32
    return %c0_i32, %c0_i32_0 : i32, i32
  }
  func.func @transform_1(%arg0: i32) -> (i32, i32) {
    %c0_i32 = arith.constant 0 : i32
    %c0_i32_0 = arith.constant 0 : i32
    %c0_i32_1 = arith.constant 0 : i32
    return %c0_i32, %c0_i32_0 : i32, i32
  }
  func.func @transform_2(%arg0: i32) -> (i32, i32) {
    %c0_i32 = arith.constant 0 : i32
    %c0_i32_0 = arith.constant 0 : i32
    %c0_i32_1 = arith.constant 0 : i32
    return %c0_i32, %c0_i32_0 : i32, i32
  }
  func.func @transform_3(%arg0: i32) -> (i32, i32) {
    %c0_i32 = arith.constant 0 : i32
    %c0_i32_0 = arith.constant 0 : i32
    %c0_i32_1 = arith.constant 0 : i32
    return %c0_i32, %c0_i32_0 : i32, i32
  }
  func.func @transform_4(%arg0: i32) -> (i32, i32) {
    %c0_i32 = arith.constant 0 : i32
    %c0_i32_0 = arith.constant 0 : i32
    %c0_i32_1 = arith.constant 0 : i32
    return %c0_i32, %c0_i32_0 : i32, i32
  }
  func.func @transform_5(%arg0: i32) -> (i32, i32) {
    %c0_i32 = arith.constant 0 : i32
    %c0_i32_0 = arith.constant 0 : i32
    %c0_i32_1 = arith.constant 0 : i32
    return %c0_i32, %c0_i32_0 : i32, i32
  }
  func.func @transform_6(%arg0: i32) -> (i32, i32) {
    %c0_i32 = arith.constant 0 : i32
    %c0_i32_0 = arith.constant 0 : i32
    %c0_i32_1 = arith.constant 0 : i32
    return %c0_i32, %c0_i32_0 : i32, i32
  }
  func.func @transform_7(%arg0: i32) -> (i32, i32) {
    %c0_i32 = arith.constant 0 : i32
    %c0_i32_0 = arith.constant 0 : i32
    %c0_i32_1 = arith.constant 0 : i32
    return %c0_i32, %c0_i32_0 : i32, i32
  }
  func.func @transform_8(%arg0: i32) -> (i32, i32) {
    %c0_i32 = arith.constant 0 : i32
    %c0_i32_0 = arith.constant 0 : i32
    %c0_i32_1 = arith.constant 0 : i32
    return %c0_i32, %c0_i32_0 : i32, i32
  }
  func.func @transform_9(%arg0: i32) -> (i32, i32) {
    %c0_i32 = arith.constant 0 : i32
    %c0_i32_0 = arith.constant 0 : i32
    %c0_i32_1 = arith.constant 0 : i32
    return %c0_i32, %c0_i32_0 : i32, i32
  }
}

</mosaic_0001>

<llo_original>
// kernel: _char_decoder_impl.1
$region0: #{_char_decoder_impl.1}
  #allocation0 [shape = 'u32[]', space=smem, size = 0x4, offset = 0x4, fixed_abs, tag = 'smem constant byte address 0x4 - core index']
  #allocation1 [shape = 'u32[72,128]{1,0:T(1,128)}', space=vmem, size = 0x9000, scoped, tag = 'internal scratch']
  #allocation2 [shape = 'f32[64,512]{1,0:T(8,128)}', space=vmem, size = 0x20000, scoped, tag = 'scratch operand']
  %s0 = inlined_call_operand.vmem [shape: s32[64,1], index: 0, kind: input, shape index: {}]
  %s1 = inlined_call_operand.vmem [shape: f32[8,128], index: 1, kind: input, shape index: {}]
  %s2 = inlined_call_operand.vmem [shape: f32[8,128], index: 2, kind: input, shape index: {}]
  %s3 = inlined_call_operand.hbm [shape: f32[128,512], index: 3, kind: input, shape index: {}]
  %s4 = inlined_call_operand.hbm [shape: f32[128,512], index: 4, kind: input, shape index: {}]
  %s5 = inlined_call_operand.hbm [shape: f32[128,128], index: 5, kind: input, shape index: {}]
  %s6 = inlined_call_operand.vmem [shape: f32[1,128], index: 6, kind: input, shape index: {}]
  %s7 = inlined_call_operand.vmem [shape: f32[64,128], index: 7, kind: output, shape index: {0}]
  %s8 = inlined_call_operand.vmem [shape: f32[8,128], index: 8, kind: output, shape index: {1}]
  %s9 = inlined_call_operand.vmem [shape: f32[8,128], index: 9, kind: output, shape index: {2}]
  %10 = xla_tuple %s7, %s8, %s9
  %s11 = sld [smem:[#allocation0]]
  $region66: #{_char_decoder_impl.1} parent=0
    _
  %s13 = ssub.s32 1, %s11
  %s14 = scalar_select 0, %s13, %s11
  $region1: #{_char_decoder_impl.1} parent=0
    #allocation3 [shape = 'u8[262144]{0}', space=vmem, size = 0x40000, scoped, tag = 'input window, operand 3, single buffered']
    #allocation4 [shape = 's32[1]{0}', space=sflag, size = 0x4, scoped, tag = 'scoped memory for _char_decoder_impl.1']
    #allocation5 [shape = 'u8[262144]{0}', space=vmem, size = 0x40000, scoped, tag = 'input window, operand 4, single buffered']
    #allocation6 [shape = 's32[1]{0}', space=sflag, size = 0x4, scoped, tag = 'scoped memory for _char_decoder_impl.1']
    #allocation7 [shape = 'u8[65536]{0}', space=vmem, size = 0x10000, scoped, tag = 'input window, operand 5, single buffered']
    %15 = vsyncpa [#allocation4], 0
    %16 = vsyncpa [#allocation6], 0
    // Predicated region
    $region2: #{_char_decoder_impl.1} parent=1 // pred_check
      _
    $region3: #{_char_decoder_impl.1} parent=1 // pred_check_branch
      %18 = sbr.rel (0) target = $region5
    $region4: #{_char_decoder_impl.1} parent=1 // pred_region
      _
    $region5: #{_char_decoder_impl.1} parent=1 // pred_fallthru
      _
    // Predicated region
    $region6: #{_char_decoder_impl.1} parent=1 // pred_check
      _
    $region7: #{_char_decoder_impl.1} parent=1 // pred_check_branch
      %20 = sbr.rel (0) target = $region9
    $region8: #{_char_decoder_impl.1} parent=1 // pred_region
      _
    $region9: #{_char_decoder_impl.1} parent=1 // pred_fallthru
      _
    // Predicated region
    $region10: #{_char_decoder_impl.1} parent=1 // pred_check
      _
    $region11: #{_char_decoder_impl.1} parent=1 // pred_check_branch
      %22 = sbr.rel (0) target = $region13
    $region12: #{_char_decoder_impl.1} parent=1 // pred_region
      _
    $region13: #{_char_decoder_impl.1} parent=1 // pred_fallthru
      _
    // Predicated region
    $region14: #{_char_decoder_impl.1} parent=1 // pred_check
      _
    $region15: #{_char_decoder_impl.1} parent=1 // pred_check_branch
      %24 = sbr.rel (0) target = $region17
    $region16: #{_char_decoder_impl.1} parent=1 // pred_region
      %26 = vsyncadd [#allocation4], 0
      %s27 = sshll.u32 %s3, 4
      %s28 = int_to_ptr.hbm [resolvable:$true] %s27
      %s29 = sshll.u32 [#allocation3], 4
      %s30 = int_to_ptr.vmem [resolvable:$true] %s29
      %35 = dma.hbm_to_vmem [thread:$0]  %s28, 8192, %s30, [#allocation4], 512, 512, 32
    $region17: #{_char_decoder_impl.1} parent=1 // pred_fallthru
      _
    // Predicated region
    $region18: #{_char_decoder_impl.1} parent=1 // pred_check
      _
    $region19: #{_char_decoder_impl.1} parent=1 // pred_check_branch
      %37 = sbr.rel (0) target = $region21
    $region20: #{_char_decoder_impl.1} parent=1 // pred_region
      %39 = vsyncadd [#allocation6], 0
      %s40 = sshll.u32 %s4, 4
      %s41 = int_to_ptr.hbm [resolvable:$true] %s40
      %s42 = sshll.u32 [#allocation5], 4
      %s43 = int_to_ptr.vmem [resolvable:$true] %s42
      %48 = dma.hbm_to_vmem [thread:$0]  %s41, 8192, %s43, [#allocation6], 512, 512, 32
    $region21: #{_char_decoder_impl.1} parent=1 // pred_fallthru
      _
    // Predicated region
    $region22: #{_char_decoder_impl.1} parent=1 // pred_check
      _
    $region23: #{_char_decoder_impl.1} parent=1 // pred_check_branch
      %50 = sbr.rel (0) target = $region25
    $region24: #{_char_decoder_impl.1} parent=1 // pred_region
      %52 = vsyncadd [#allocation6], 0
      %s53 = sshll.u32 %s5, 4
      %s54 = int_to_ptr.hbm [resolvable:$true] %s53
      %s55 = sshll.u32 [#allocation7], 4
      %s56 = int_to_ptr.vmem [resolvable:$true] %s55
      %61 = dma.hbm_to_vmem [thread:$0]  %s54, 2048, %s56, [#allocation6], 128, 128, 8
    $region25: #{_char_decoder_impl.1} parent=1 // pred_fallthru
      _
    // Predicated region
    $region26: #{_char_decoder_impl.1} parent=1 // pred_check
      _
    $region27: #{_char_decoder_impl.1} parent=1 // pred_check_branch
      %63 = sbr.rel (0) target = $region29
    $region28: #{_char_decoder_impl.1} parent=1 // pred_region
      _
    $region29: #{_char_decoder_impl.1} parent=1 // pred_fallthru
      _
    // Predicated region
    $region30: #{_char_decoder_impl.1} parent=1 // pred_check
      _
    $region31: #{_char_decoder_impl.1} parent=1 // pred_check_branch
      %65 = sbr.rel (0) target = $region33
    $region32: #{_char_decoder_impl.1} parent=1 // pred_region
      %67 = dma.done [#allocation4], 8192
    $region33: #{_char_decoder_impl.1} parent=1 // pred_fallthru
      _
    // Predicated region
    $region34: #{_char_decoder_impl.1} parent=1 // pred_check
      _
    $region35: #{_char_decoder_impl.1} parent=1 // pred_check_branch
      %69 = sbr.rel (0) target = $region37
    $region36: #{_char_decoder_impl.1} parent=1 // pred_region
      %71 = dma.done [#allocation6], 8192
    $region37: #{_char_decoder_impl.1} parent=1 // pred_fallthru
      _
    // Predicated region
    $region38: #{_char_decoder_impl.1} parent=1 // pred_check
      _
    $region39: #{_char_decoder_impl.1} parent=1 // pred_check_branch
      %73 = sbr.rel (0) target = $region41
    $region40: #{_char_decoder_impl.1} parent=1 // pred_region
      %75 = dma.done [#allocation6], 2048
    $region41: #{_char_decoder_impl.1} parent=1 // pred_fallthru
      _
    %v76 = vld [vmem:[%s0] sm:$0xff]
    %v77 = vld [vmem:[%s0 + $0x8] sm:$0xff]
    %v78 = vld [vmem:[%s0 + $0x10] sm:$0xff]
    %v79 = vld [vmem:[%s0 + $0x18] sm:$0xff]
    %v80 = vld [vmem:[%s0 + $0x20] sm:$0xff]
    %v81 = vld [vmem:[%s0 + $0x28] sm:$0xff]
    %v82 = vld [vmem:[%s0 + $0x30] sm:$0xff]
    %v83 = vld [vmem:[%s0 + $0x38] sm:$0xff]
    %v84 = vlaneseq
    %v85 = vand.u32 %v84, 127
    %86 = vset.pattern.permute.xlu0 0
    %87 = vperm.xlu0 %86, %v76
    %v88 = vpop.permute.xlu0 %87
    %89 = vset.pattern.permute.xlu0 0
    %90 = vperm.xlu0 %89, %v77
    %v91 = vpop.permute.xlu0 %90
    %92 = vset.pattern.permute.xlu0 0
    %93 = vperm.xlu0 %92, %v78
    %v94 = vpop.permute.xlu0 %93
    %95 = vset.pattern.permute.xlu0 0
    %96 = vperm.xlu0 %95, %v79
    %v97 = vpop.permute.xlu0 %96
    %98 = vset.pattern.permute.xlu0 0
    %99 = vperm.xlu0 %98, %v80
    %v100 = vpop.permute.xlu0 %99
    %101 = vset.pattern.permute.xlu0 0
    %102 = vperm.xlu0 %101, %v81
    %v103 = vpop.permute.xlu0 %102
    %104 = vset.pattern.permute.xlu0 0
    %105 = vperm.xlu0 %104, %v82
    %v106 = vpop.permute.xlu0 %105
    %107 = vset.pattern.permute.xlu0 0
    %108 = vperm.xlu0 %107, %v83
    %v109 = vpop.permute.xlu0 %108
    %vm110 = vcmp.eq.s32.totalorder %v88, %v85
    %vm111 = vcmp.eq.s32.totalorder %v91, %v85
    %vm112 = vcmp.eq.s32.totalorder %v94, %v85
    %vm113 = vcmp.eq.s32.totalorder %v97, %v85
    %vm114 = vcmp.eq.s32.totalorder %v100, %v85
    %vm115 = vcmp.eq.s32.totalorder %v103, %v85
    %vm116 = vcmp.eq.s32.totalorder %v106, %v85
    %vm117 = vcmp.eq.s32.totalorder %v109, %v85
    %v118 = vsel %vm110, 1, 0
    %v119 = vsel %vm111, 1, 0
    %v120 = vsel %vm112, 1, 0
    %v121 = vsel %vm113, 1, 0
    %v122 = vsel %vm114, 1, 0
    %v123 = vsel %vm115, 1, 0
    %v124 = vsel %vm116, 1, 0
    %v125 = vsel %vm117, 1, 0
    %v126 = vcvt.s32.f32 %v118
    %v127 = vcvt.s32.f32 %v119
    %v128 = vcvt.s32.f32 %v120
    %v129 = vcvt.s32.f32 %v121
    %v130 = vcvt.s32.f32 %v122
    %v131 = vcvt.s32.f32 %v123
    %v132 = vcvt.s32.f32 %v124
    %v133 = vcvt.s32.f32 %v125
    %v134 = vld [vmem:[#allocation3] sm:$0xff]
    %v135 = vld [vmem:[#allocation3 + $0x8] sm:$0xff]
    %v136 = vld [vmem:[#allocation3 + $0x10] sm:$0xff]
    %v137 = vld [vmem:[#allocation3 + $0x18] sm:$0xff]
    %v138 = vld [vmem:[#allocation3 + $0x20] sm:$0xff]
    %v139 = vld [vmem:[#allocation3 + $0x28] sm:$0xff]
    %v140 = vld [vmem:[#allocation3 + $0x30] sm:$0xff]
    %v141 = vld [vmem:[#allocation3 + $0x38] sm:$0xff]
    %v142 = vld [vmem:[#allocation3 + $0x40] sm:$0xff]
    %v143 = vld [vmem:[#allocation3 + $0x48] sm:$0xff]
    %v144 = vld [vmem:[#allocation3 + $0x50] sm:$0xff]
    %v145 = vld [vmem:[#allocation3 + $0x58] sm:$0xff]
    %v146 = vld [vmem:[#allocation3 + $0x60] sm:$0xff]
    %v147 = vld [vmem:[#allocation3 + $0x68] sm:$0xff]
    %v148 = vld [vmem:[#allocation3 + $0x70] sm:$0xff]
    %v149 = vld [vmem:[#allocation3 + $0x78] sm:$0xff]
    %v150 = vld [vmem:[#allocation3 + $0x80] sm:$0xff]
    %v151 = vld [vmem:[#allocation3 + $0x88] sm:$0xff]
    %v152 = vld [vmem:[#allocation3 + $0x90] sm:$0xff]
    %v153 = vld [vmem:[#allocation3 + $0x98] sm:$0xff]
    %v154 = vld [vmem:[#allocation3 + $0xa0] sm:$0xff]
    %v155 = vld [vmem:[#allocation3 + $0xa8] sm:$0xff]
    %v156 = vld [vmem:[#allocation3 + $0xb0] sm:$0xff]
    %v157 = vld [vmem:[#allocation3 + $0xb8] sm:$0xff]
    %v158 = vld [vmem:[#allocation3 + $0xc0] sm:$0xff]
    %v159 = vld [vmem:[#allocation3 + $0xc8] sm:$0xff]
    %v160 = vld [vmem:[#allocation3 + $0xd0] sm:$0xff]
    %v161 = vld [vmem:[#allocation3 + $0xd8] sm:$0xff]
    %v162 = vld [vmem:[#allocation3 + $0xe0] sm:$0xff]
    %v163 = vld [vmem:[#allocation3 + $0xe8] sm:$0xff]
    %v164 = vld [vmem:[#allocation3 + $0xf0] sm:$0xff]
    %v165 = vld [vmem:[#allocation3 + $0xf8] sm:$0xff]
    %v166 = vld [vmem:[#allocation3 + $0x100] sm:$0xff]
    %v167 = vld [vmem:[#allocation3 + $0x108] sm:$0xff]
    %v168 = vld [vmem:[#allocation3 + $0x110] sm:$0xff]
    %v169 = vld [vmem:[#allocation3 + $0x118] sm:$0xff]
    %v170 = vld [vmem:[#allocation3 + $0x120] sm:$0xff]
    %v171 = vld [vmem:[#allocation3 + $0x128] sm:$0xff]
    %v172 = vld [vmem:[#allocation3 + $0x130] sm:$0xff]
    %v173 = vld [vmem:[#allocation3 + $0x138] sm:$0xff]
    %v174 = vld [vmem:[#allocation3 + $0x140] sm:$0xff]
    %v175 = vld [vmem:[#allocation3 + $0x148] sm:$0xff]
    %v176 = vld [vmem:[#allocation3 + $0x150] sm:$0xff]
    %v177 = vld [vmem:[#allocation3 + $0x158] sm:$0xff]
    %v178 = vld [vmem:[#allocation3 + $0x160] sm:$0xff]
    %v179 = vld [vmem:[#allocation3 + $0x168] sm:$0xff]
    %v180 = vld [vmem:[#allocation3 + $0x170] sm:$0xff]
    %v181 = vld [vmem:[#allocation3 + $0x178] sm:$0xff]
    %v182 = vld [vmem:[#allocation3 + $0x180] sm:$0xff]
    %v183 = vld [vmem:[#allocation3 + $0x188] sm:$0xff]
    %v184 = vld [vmem:[#allocation3 + $0x190] sm:$0xff]
    %v185 = vld [vmem:[#allocation3 + $0x198] sm:$0xff]
    %v186 = vld [vmem:[#allocation3 + $0x1a0] sm:$0xff]
    %v187 = vld [vmem:[#allocation3 + $0x1a8] sm:$0xff]
    %v188 = vld [vmem:[#allocation3 + $0x1b0] sm:$0xff]
    %v189 = vld [vmem:[#allocation3 + $0x1b8] sm:$0xff]
    %v190 = vld [vmem:[#allocation3 + $0x1c0] sm:$0xff]
    %v191 = vld [vmem:[#allocation3 + $0x1c8] sm:$0xff]
    %v192 = vld [vmem:[#allocation3 + $0x1d0] sm:$0xff]
    %v193 = vld [vmem:[#allocation3 + $0x1d8] sm:$0xff]
    %v194 = vld [vmem:[#allocation3 + $0x1e0] sm:$0xff]
    %v195 = vld [vmem:[#allocation3 + $0x1e8] sm:$0xff]
    %v196 = vld [vmem:[#allocation3 + $0x1f0] sm:$0xff]
    %v197 = vld [vmem:[#allocation3 + $0x1f8] sm:$0xff]
    %198 = vmatpush.msra.mxu0 %v194
    %199 = vmatpush.msra.mxu0 %v190
    %200 = vmatpush.msra.mxu0 %v186
    %201 = vmatpush.msra.mxu0 %v182
    %202 = vmatpush.msra.mxu0 %v178
    %203 = vmatpush.msra.mxu0 %v174
    %204 = vmatpush.msra.mxu0 %v170
    %205 = vmatpush.msra.mxu0 %v166
    %206 = vmatpush.msra.mxu0 %v162
    %207 = vmatpush.msra.mxu0 %v158
    %208 = vmatpush.msra.mxu0 %v154
    %209 = vmatpush.msra.mxu0 %v150
    %210 = vmatpush.msra.mxu0 %v146
    %211 = vmatpush.msra.mxu0 %v142
    %212 = vmatpush.msra.mxu0 %v138
    %213 = vmatpush.msra.mxu0 %v134
    %214 = vmatmul.f32.gmra.mxu0 %v126
    %v215 = vpop.f32.mrf.mxu0
    %v216 = vadd.f32 0.0, %v215
    %217 = vmatmul.f32.gmra.mxu0 %v127
    %v218 = vpop.f32.mrf.mxu0
    %v219 = vadd.f32 0.0, %v218
    %220 = vmatmul.f32.gmra.mxu0 %v128
    %v221 = vpop.f32.mrf.mxu0
    %v222 = vadd.f32 0.0, %v221
    %223 = vmatmul.f32.gmra.mxu0 %v129
    %v224 = vpop.f32.mrf.mxu0
    %v225 = vadd.f32 0.0, %v224
    %226 = vmatmul.f32.gmra.mxu0 %v130
    %v227 = vpop.f32.mrf.mxu0
    %v228 = vadd.f32 0.0, %v227
    %229 = vmatmul.f32.gmra.mxu0 %v131
    %v230 = vpop.f32.mrf.mxu0
    %v231 = vadd.f32 0.0, %v230
    %232 = vmatmul.f32.gmra.mxu0 %v132
    %v233 = vpop.f32.mrf.mxu0
    %v234 = vadd.f32 0.0, %v233
    %235 = vmatmul.f32.gmra.mxu0 %v133
    %v236 = vpop.f32.mrf.mxu0
    %v237 = vadd.f32 0.0, %v236
    %238 = vdwg.mxu0
    %239 = vmatpush.msra.mxu0 %v195
    %240 = vmatpush.msra.mxu0 %v191
    %241 = vmatpush.msra.mxu0 %v187
    %242 = vmatpush.msra.mxu0 %v183
    %243 = vmatpush.msra.mxu0 %v179
    %244 = vmatpush.msra.mxu0 %v175
    %245 = vmatpush.msra.mxu0 %v171
    %246 = vmatpush.msra.mxu0 %v167
    %247 = vmatpush.msra.mxu0 %v163
    %248 = vmatpush.msra.mxu0 %v159
    %249 = vmatpush.msra.mxu0 %v155
    %250 = vmatpush.msra.mxu0 %v151
    %251 = vmatpush.msra.mxu0 %v147
    %252 = vmatpush.msra.mxu0 %v143
    %253 = vmatpush.msra.mxu0 %v139
    %254 = vmatpush.msra.mxu0 %v135
    %255 = vmatmul.f32.gmra.mxu0 %v126
    %v256 = vpop.f32.mrf.mxu0
    %v257 = vadd.f32 0.0, %v256
    %258 = vmatmul.f32.gmra.mxu0 %v127
    %v259 = vpop.f32.mrf.mxu0
    %v260 = vadd.f32 0.0, %v259
    %261 = vmatmul.f32.gmra.mxu0 %v128
    %v262 = vpop.f32.mrf.mxu0
    %v263 = vadd.f32 0.0, %v262
    %264 = vmatmul.f32.gmra.mxu0 %v129
    %v265 = vpop.f32.mrf.mxu0
    %v266 = vadd.f32 0.0, %v265
    %267 = vmatmul.f32.gmra.mxu0 %v130
    %v268 = vpop.f32.mrf.mxu0
    %v269 = vadd.f32 0.0, %v268
    %270 = vmatmul.f32.gmra.mxu0 %v131
    %v271 = vpop.f32.mrf.mxu0
    %v272 = vadd.f32 0.0, %v271
    %273 = vmatmul.f32.gmra.mxu0 %v132
    %v274 = vpop.f32.mrf.mxu0
    %v275 = vadd.f32 0.0, %v274
    %276 = vmatmul.f32.gmra.mxu0 %v133
    %v277 = vpop.f32.mrf.mxu0
    %v278 = vadd.f32 0.0, %v277
    %279 = vdwg.mxu0
    %280 = vmatpush.msra.mxu0 %v196
    %281 = vmatpush.msra.mxu0 %v192
    %282 = vmatpush.msra.mxu0 %v188
    %283 = vmatpush.msra.mxu0 %v184
    %284 = vmatpush.msra.mxu0 %v180
    %285 = vmatpush.msra.mxu0 %v176
    %286 = vmatpush.msra.mxu0 %v172
    %287 = vmatpush.msra.mxu0 %v168
    %288 = vmatpush.msra.mxu0 %v164
    %289 = vmatpush.msra.mxu0 %v160
    %290 = vmatpush.msra.mxu0 %v156
    %291 = vmatpush.msra.mxu0 %v152
    %292 = vmatpush.msra.mxu0 %v148
    %293 = vmatpush.msra.mxu0 %v144
    %294 = vmatpush.msra.mxu0 %v140
    %295 = vmatpush.msra.mxu0 %v136
    %296 = vmatmul.f32.gmra.mxu0 %v126
    %v297 = vpop.f32.mrf.mxu0
    %v298 = vadd.f32 0.0, %v297
    %299 = vmatmul.f32.gmra.mxu0 %v127
    %v300 = vpop.f32.mrf.mxu0
    %v301 = vadd.f32 0.0, %v300
    %302 = vmatmul.f32.gmra.mxu0 %v128
    %v303 = vpop.f32.mrf.mxu0
    %v304 = vadd.f32 0.0, %v303
    %305 = vmatmul.f32.gmra.mxu0 %v129
    %v306 = vpop.f32.mrf.mxu0
    %v307 = vadd.f32 0.0, %v306
    %308 = vmatmul.f32.gmra.mxu0 %v130
    %v309 = vpop.f32.mrf.mxu0
    %v310 = vadd.f32 0.0, %v309
    %311 = vmatmul.f32.gmra.mxu0 %v131
    %v312 = vpop.f32.mrf.mxu0
    %v313 = vadd.f32 0.0, %v312
    %314 = vmatmul.f32.gmra.mxu0 %v132
    %v315 = vpop.f32.mrf.mxu0
    %v316 = vadd.f32 0.0, %v315
    %317 = vmatmul.f32.gmra.mxu0 %v133
    %v318 = vpop.f32.mrf.mxu0
    %v319 = vadd.f32 0.0, %v318
    %320 = vdwg.mxu0
    %321 = vmatpush.msra.mxu0 %v197
    %322 = vmatpush.msra.mxu0 %v193
    %323 = vmatpush.msra.mxu0 %v189
    %324 = vmatpush.msra.mxu0 %v185
    %325 = vmatpush.msra.mxu0 %v181
    %326 = vmatpush.msra.mxu0 %v177
    %327 = vmatpush.msra.mxu0 %v173
    %328 = vmatpush.msra.mxu0 %v169
    %329 = vmatpush.msra.mxu0 %v165
    %330 = vmatpush.msra.mxu0 %v161
    %331 = vmatpush.msra.mxu0 %v157
    %332 = vmatpush.msra.mxu0 %v153
    %333 = vmatpush.msra.mxu0 %v149
    %334 = vmatpush.msra.mxu0 %v145
    %335 = vmatpush.msra.mxu0 %v141
    %336 = vmatpush.msra.mxu0 %v137
    %337 = vmatmul.f32.gmra.mxu0 %v126
    %v338 = vpop.f32.mrf.mxu0
    %v339 = vadd.f32 0.0, %v338
    %340 = vmatmul.f32.gmra.mxu0 %v127
    %v341 = vpop.f32.mrf.mxu0
    %v342 = vadd.f32 0.0, %v341
    %343 = vmatmul.f32.gmra.mxu0 %v128
    %v344 = vpop.f32.mrf.mxu0
    %v345 = vadd.f32 0.0, %v344
    %346 = vmatmul.f32.gmra.mxu0 %v129
    %v347 = vpop.f32.mrf.mxu0
    %v348 = vadd.f32 0.0, %v347
    %349 = vmatmul.f32.gmra.mxu0 %v130
    %v350 = vpop.f32.mrf.mxu0
    %v351 = vadd.f32 0.0, %v350
    %352 = vmatmul.f32.gmra.mxu0 %v131
    %v353 = vpop.f32.mrf.mxu0
    %v354 = vadd.f32 0.0, %v353
    %355 = vmatmul.f32.gmra.mxu0 %v132
    %v356 = vpop.f32.mrf.mxu0
    %v357 = vadd.f32 0.0, %v356
    %358 = vmatmul.f32.gmra.mxu0 %v133
    %v359 = vpop.f32.mrf.mxu0
    %v360 = vadd.f32 0.0, %v359
    %361 = vdwg.mxu0
    %362 = vst [vmem:[#allocation2] sm:$0xff] %v216
    %363 = vst [vmem:[#allocation2 + $0x8] sm:$0xff] %v257
    %364 = vst [vmem:[#allocation2 + $0x10] sm:$0xff] %v298
    %365 = vst [vmem:[#allocation2 + $0x18] sm:$0xff] %v339
    %366 = vst [vmem:[#allocation2 + $0x20] sm:$0xff] %v219
    %367 = vst [vmem:[#allocation2 + $0x28] sm:$0xff] %v260
    %368 = vst [vmem:[#allocation2 + $0x30] sm:$0xff] %v301
    %369 = vst [vmem:[#allocation2 + $0x38] sm:$0xff] %v342
    %370 = vst [vmem:[#allocation2 + $0x40] sm:$0xff] %v222
    %371 = vst [vmem:[#allocation2 + $0x48] sm:$0xff] %v263
    %372 = vst [vmem:[#allocation2 + $0x50] sm:$0xff] %v304
    %373 = vst [vmem:[#allocation2 + $0x58] sm:$0xff] %v345
    %374 = vst [vmem:[#allocation2 + $0x60] sm:$0xff] %v225
    %375 = vst [vmem:[#allocation2 + $0x68] sm:$0xff] %v266
    %376 = vst [vmem:[#allocation2 + $0x70] sm:$0xff] %v307
    %377 = vst [vmem:[#allocation2 + $0x78] sm:$0xff] %v348
    %378 = vst [vmem:[#allocation2 + $0x80] sm:$0xff] %v228
    %379 = vst [vmem:[#allocation2 + $0x88] sm:$0xff] %v269
    %380 = vst [vmem:[#allocation2 + $0x90] sm:$0xff] %v310
    %381 = vst [vmem:[#allocation2 + $0x98] sm:$0xff] %v351
    %382 = vst [vmem:[#allocation2 + $0xa0] sm:$0xff] %v231
    %383 = vst [vmem:[#allocation2 + $0xa8] sm:$0xff] %v272
    %384 = vst [vmem:[#allocation2 + $0xb0] sm:$0xff] %v313
    %385 = vst [vmem:[#allocation2 + $0xb8] sm:$0xff] %v354
    %386 = vst [vmem:[#allocation2 + $0xc0] sm:$0xff] %v234
    %387 = vst [vmem:[#allocation2 + $0xc8] sm:$0xff] %v275
    %388 = vst [vmem:[#allocation2 + $0xd0] sm:$0xff] %v316
    %389 = vst [vmem:[#allocation2 + $0xd8] sm:$0xff] %v357
    %390 = vst [vmem:[#allocation2 + $0xe0] sm:$0xff] %v237
    %391 = vst [vmem:[#allocation2 + $0xe8] sm:$0xff] %v278
    %392 = vst [vmem:[#allocation2 + $0xf0] sm:$0xff] %v319
    %393 = vst [vmem:[#allocation2 + $0xf8] sm:$0xff] %v360
    %v394 = vld [vmem:[#allocation5] sm:$0xff]
    %v395 = vld [vmem:[#allocation5 + $0x8] sm:$0xff]
    %v396 = vld [vmem:[#allocation5 + $0x10] sm:$0xff]
    %v397 = vld [vmem:[#allocation5 + $0x18] sm:$0xff]
    %v398 = vld [vmem:[#allocation5 + $0x20] sm:$0xff]
    %v399 = vld [vmem:[#allocation5 + $0x28] sm:$0xff]
    %v400 = vld [vmem:[#allocation5 + $0x30] sm:$0xff]
    %v401 = vld [vmem:[#allocation5 + $0x38] sm:$0xff]
    %v402 = vld [vmem:[#allocation5 + $0x40] sm:$0xff]
    %v403 = vld [vmem:[#allocation5 + $0x48] sm:$0xff]
    %v404 = vld [vmem:[#allocation5 + $0x50] sm:$0xff]
    %v405 = vld [vmem:[#allocation5 + $0x58] sm:$0xff]
    %v406 = vld [vmem:[#allocation5 + $0x60] sm:$0xff]
    %v407 = vld [vmem:[#allocation5 + $0x68] sm:$0xff]
    %v408 = vld [vmem:[#allocation5 + $0x70] sm:$0xff]
    %v409 = vld [vmem:[#allocation5 + $0x78] sm:$0xff]
    %v410 = vld [vmem:[#allocation5 + $0x80] sm:$0xff]
    %v411 = vld [vmem:[#allocation5 + $0x88] sm:$0xff]
    %v412 = vld [vmem:[#allocation5 + $0x90] sm:$0xff]
    %v413 = vld [vmem:[#allocation5 + $0x98] sm:$0xff]
    %v414 = vld [vmem:[#allocation5 + $0xa0] sm:$0xff]
    %v415 = vld [vmem:[#allocation5 + $0xa8] sm:$0xff]
    %v416 = vld [vmem:[#allocation5 + $0xb0] sm:$0xff]
    %v417 = vld [vmem:[#allocation5 + $0xb8] sm:$0xff]
    %v418 = vld [vmem:[#allocation5 + $0xc0] sm:$0xff]
    %v419 = vld [vmem:[#allocation5 + $0xc8] sm:$0xff]
    %v420 = vld [vmem:[#allocation5 + $0xd0] sm:$0xff]
    %v421 = vld [vmem:[#allocation5 + $0xd8] sm:$0xff]
    %v422 = vld [vmem:[#allocation5 + $0xe0] sm:$0xff]
    %v423 = vld [vmem:[#allocation5 + $0xe8] sm:$0xff]
    %v424 = vld [vmem:[#allocation5 + $0xf0] sm:$0xff]
    %v425 = vld [vmem:[#allocation5 + $0xf8] sm:$0xff]
    %v426 = vld [vmem:[#allocation5 + $0x100] sm:$0xff]
    %v427 = vld [vmem:[#allocation5 + $0x108] sm:$0xff]
    %v428 = vld [vmem:[#allocation5 + $0x110] sm:$0xff]
    %v429 = vld [vmem:[#allocation5 + $0x118] sm:$0xff]
    %v430 = vld [vmem:[#allocation5 + $0x120] sm:$0xff]
    %v431 = vld [vmem:[#allocation5 + $0x128] sm:$0xff]
    %v432 = vld [vmem:[#allocation5 + $0x130] sm:$0xff]
    %v433 = vld [vmem:[#allocation5 + $0x138] sm:$0xff]
    %v434 = vld [vmem:[#allocation5 + $0x140] sm:$0xff]
    %v435 = vld [vmem:[#allocation5 + $0x148] sm:$0xff]
    %v436 = vld [vmem:[#allocation5 + $0x150] sm:$0xff]
    %v437 = vld [vmem:[#allocation5 + $0x158] sm:$0xff]
    %v438 = vld [vmem:[#allocation5 + $0x160] sm:$0xff]
    %v439 = vld [vmem:[#allocation5 + $0x168] sm:$0xff]
    %v440 = vld [vmem:[#allocation5 + $0x170] sm:$0xff]
    %v441 = vld [vmem:[#allocation5 + $0x178] sm:$0xff]
    %v442 = vld [vmem:[#allocation5 + $0x180] sm:$0xff]
    %v443 = vld [vmem:[#allocation5 + $0x188] sm:$0xff]
    %v444 = vld [vmem:[#allocation5 + $0x190] sm:$0xff]
    %v445 = vld [vmem:[#allocation5 + $0x198] sm:$0xff]
    %v446 = vld [vmem:[#allocation5 + $0x1a0] sm:$0xff]
    %v447 = vld [vmem:[#allocation5 + $0x1a8] sm:$0xff]
    %v448 = vld [vmem:[#allocation5 + $0x1b0] sm:$0xff]
    %v449 = vld [vmem:[#allocation5 + $0x1b8] sm:$0xff]
    %v450 = vld [vmem:[#allocation5 + $0x1c0] sm:$0xff]
    %v451 = vld [vmem:[#allocation5 + $0x1c8] sm:$0xff]
    %v452 = vld [vmem:[#allocation5 + $0x1d0] sm:$0xff]
    %v453 = vld [vmem:[#allocation5 + $0x1d8] sm:$0xff]
    %v454 = vld [vmem:[#allocation5 + $0x1e0] sm:$0xff]
    %v455 = vld [vmem:[#allocation5 + $0x1e8] sm:$0xff]
    %v456 = vld [vmem:[#allocation5 + $0x1f0] sm:$0xff]
    %v457 = vld [vmem:[#allocation5 + $0x1f8] sm:$0xff]
    %v458 = vld [vmem:[#allocation7] sm:$0xff]
    %v459 = vld [vmem:[#allocation7 + $0x8] sm:$0xff]
    %v460 = vld [vmem:[#allocation7 + $0x10] sm:$0xff]
    %v461 = vld [vmem:[#allocation7 + $0x18] sm:$0xff]
    %v462 = vld [vmem:[#allocation7 + $0x20] sm:$0xff]
    %v463 = vld [vmem:[#allocation7 + $0x28] sm:$0xff]
    %v464 = vld [vmem:[#allocation7 + $0x30] sm:$0xff]
    %v465 = vld [vmem:[#allocation7 + $0x38] sm:$0xff]
    %v466 = vld [vmem:[#allocation7 + $0x40] sm:$0xff]
    %v467 = vld [vmem:[#allocation7 + $0x48] sm:$0xff]
    %v468 = vld [vmem:[#allocation7 + $0x50] sm:$0xff]
    %v469 = vld [vmem:[#allocation7 + $0x58] sm:$0xff]
    %v470 = vld [vmem:[#allocation7 + $0x60] sm:$0xff]
    %v471 = vld [vmem:[#allocation7 + $0x68] sm:$0xff]
    %v472 = vld [vmem:[#allocation7 + $0x70] sm:$0xff]
    %v473 = vld [vmem:[#allocation7 + $0x78] sm:$0xff]
    %v474 = vld [vmem:[%s6] sm:$0x1]
    %v476 = vperm.slane %v474, 0
    %v478 = vld [vmem:[%s1] sm:$0xff]
    %v479 = vld [vmem:[%s2] sm:$0xff]
    %s480 = smul.u32 0, 4
    %s481 = smul.addr %s480, 8
    %s482 = scalar_lea.vmem [#allocation2], %s481
    %v483 = vld [vmem:[%s482] sm:$0xff]
    %v484 = vld [vmem:[%s482 + $0x8] sm:$0xff]
    %v485 = vld [vmem:[%s482 + $0x10] sm:$0xff]
    %v486 = vld [vmem:[%s482 + $0x18] sm:$0xff]
    %487 = vmatpush.msra.mxu0 %v454
    %488 = vmatpush.msra.mxu0 %v450
    %489 = vmatpush.msra.mxu0 %v446
    %490 = vmatpush.msra.mxu0 %v442
    %491 = vmatpush.msra.mxu0 %v438
    %492 = vmatpush.msra.mxu0 %v434
    %493 = vmatpush.msra.mxu0 %v430
    %494 = vmatpush.msra.mxu0 %v426
    %495 = vmatpush.msra.mxu0 %v422
    %496 = vmatpush.msra.mxu0 %v418
    %497 = vmatpush.msra.mxu0 %v414
    %498 = vmatpush.msra.mxu0 %v410
    %499 = vmatpush.msra.mxu0 %v406
    %500 = vmatpush.msra.mxu0 %v402
    %501 = vmatpush.msra.mxu0 %v398
    %502 = vmatpush.msra.mxu0 %v394
    %503 = vmatmul.f32.gmra.mxu0 %v478
    %v504 = vpop.f32.mrf.mxu0
    %v505 = vadd.f32 0.0, %v504
    %506 = vdwg.mxu0
    %507 = vmatpush.msra.mxu0 %v455
    %508 = vmatpush.msra.mxu0 %v451
    %509 = vmatpush.msra.mxu0 %v447
    %510 = vmatpush.msra.mxu0 %v443
    %511 = vmatpush.msra.mxu0 %v439
    %512 = vmatpush.msra.mxu0 %v435
    %513 = vmatpush.msra.mxu0 %v431
    %514 = vmatpush.msra.mxu0 %v427
    %515 = vmatpush.msra.mxu0 %v423
    %516 = vmatpush.msra.mxu0 %v419
    %517 = vmatpush.msra.mxu0 %v415
    %518 = vmatpush.msra.mxu0 %v411
    %519 = vmatpush.msra.mxu0 %v407
    %520 = vmatpush.msra.mxu0 %v403
    %521 = vmatpush.msra.mxu0 %v399
    %522 = vmatpush.msra.mxu0 %v395
    %523 = vmatmul.f32.gmra.mxu0 %v478
    %v524 = vpop.f32.mrf.mxu0
    %v525 = vadd.f32 0.0, %v524
    %526 = vdwg.mxu0
    %527 = vmatpush.msra.mxu0 %v456
    %528 = vmatpush.msra.mxu0 %v452
    %529 = vmatpush.msra.mxu0 %v448
    %530 = vmatpush.msra.mxu0 %v444
    %531 = vmatpush.msra.mxu0 %v440
    %532 = vmatpush.msra.mxu0 %v436
    %533 = vmatpush.msra.mxu0 %v432
    %534 = vmatpush.msra.mxu0 %v428
    %535 = vmatpush.msra.mxu0 %v424
    %536 = vmatpush.msra.mxu0 %v420
    %537 = vmatpush.msra.mxu0 %v416
    %538 = vmatpush.msra.mxu0 %v412
    %539 = vmatpush.msra.mxu0 %v408
    %540 = vmatpush.msra.mxu0 %v404
    %541 = vmatpush.msra.mxu0 %v400
    %542 = vmatpush.msra.mxu0 %v396
    %543 = vmatmul.f32.gmra.mxu0 %v478
    %v544 = vpop.f32.mrf.mxu0
    %v545 = vadd.f32 0.0, %v544
    %546 = vdwg.mxu0
    %547 = vmatpush.msra.mxu0 %v457
    %548 = vmatpush.msra.mxu0 %v453
    %549 = vmatpush.msra.mxu0 %v449
    %550 = vmatpush.msra.mxu0 %v445
    %551 = vmatpush.msra.mxu0 %v441
    %552 = vmatpush.msra.mxu0 %v437
    %553 = vmatpush.msra.mxu0 %v433
    %554 = vmatpush.msra.mxu0 %v429
    %555 = vmatpush.msra.mxu0 %v425
    %556 = vmatpush.msra.mxu0 %v421
    %557 = vmatpush.msra.mxu0 %v417
    %558 = vmatpush.msra.mxu0 %v413
    %559 = vmatpush.msra.mxu0 %v409
    %560 = vmatpush.msra.mxu0 %v405
    %561 = vmatpush.msra.mxu0 %v401
    %562 = vmatpush.msra.mxu0 %v397
    %563 = vmatmul.f32.gmra.mxu0 %v478
    %v564 = vpop.f32.mrf.mxu0
    %v565 = vadd.f32 0.0, %v564
    %566 = vdwg.mxu0
    %v567 = vadd.f32 %v483, %v505
    %v568 = vadd.f32 %v484, %v525
    %v569 = vadd.f32 %v485, %v545
    %v570 = vadd.f32 %v486, %v565
    %v571 = vmul.f32 %v567, 0.5
    %v572 = vtanh.pop %v571
    %v573 = vadd.f32 %v572, 1.0
    %v574 = vmul.f32 %v573, 0.5
    %v575 = vmul.f32 %v568, 0.5
    %v576 = vtanh.pop %v575
    %v577 = vadd.f32 %v576, 1.0
    %v578 = vmul.f32 %v577, 0.5
    %v579 = vtanh.pop %v569
    %v580 = vmul.f32 %v570, 0.5
    %v581 = vtanh.pop %v580
    %v582 = vadd.f32 %v581, 1.0
    %v583 = vmul.f32 %v582, 0.5
    %v584 = vmul.f32 %v578, %v479
    %v585 = vmul.f32 %v574, %v579
    %v586 = vadd.f32 %v584, %v585
    %v587 = vtanh.pop %v586
    %v588 = vmul.f32 %v583, %v587
    %589 = vmatpush.msra.mxu0 %v473
    %590 = vmatpush.msra.mxu0 %v472
    %591 = vmatpush.msra.mxu0 %v471
    %592 = vmatpush.msra.mxu0 %v470
    %593 = vmatpush.msra.mxu0 %v469
    %594 = vmatpush.msra.mxu0 %v468
    %595 = vmatpush.msra.mxu0 %v467
    %596 = vmatpush.msra.mxu0 %v466
    %597 = vmatpush.msra.mxu0 %v465
    %598 = vmatpush.msra.mxu0 %v464
    %599 = vmatpush.msra.mxu0 %v463
    %600 = vmatpush.msra.mxu0 %v462
    %601 = vmatpush.msra.mxu0 %v461
    %602 = vmatpush.msra.mxu0 %v460
    %603 = vmatpush.msra.mxu0 %v459
    %604 = vmatpush.msra.mxu0 %v458
    %605 = vmatmul.f32.gmra.mxu0 %v588
    %v606 = vpop.f32.mrf.mxu0
    %v607 = vadd.f32 %v476, %v606
    %608 = vdwg.mxu0
    %609 = vst [vmem:[%s7] sm:$0xff] %v607
    %s610 = smul.u32 1, 4
    %s611 = smul.addr %s610, 8
    %s612 = scalar_lea.vmem [#allocation2], %s611
    %v613 = vld [vmem:[%s612] sm:$0xff]
    %v614 = vld [vmem:[%s612 + $0x8] sm:$0xff]
    %v615 = vld [vmem:[%s612 + $0x10] sm:$0xff]
    %v616 = vld [vmem:[%s612 + $0x18] sm:$0xff]
    %617 = vmatpush.msra.mxu0 %v454
    %618 = vmatpush.msra.mxu0 %v450
    %619 = vmatpush.msra.mxu0 %v446
    %620 = vmatpush.msra.mxu0 %v442
    %621 = vmatpush.msra.mxu0 %v438
    %622 = vmatpush.msra.mxu0 %v434
    %623 = vmatpush.msra.mxu0 %v430
    %624 = vmatpush.msra.mxu0 %v426
    %625 = vmatpush.msra.mxu0 %v422
    %626 = vmatpush.msra.mxu0 %v418
    %627 = vmatpush.msra.mxu0 %v414
    %628 = vmatpush.msra.mxu0 %v410
    %629 = vmatpush.msra.mxu0 %v406
    %630 = vmatpush.msra.mxu0 %v402
    %631 = vmatpush.msra.mxu0 %v398
    %632 = vmatpush.msra.mxu0 %v394
    %633 = vmatmul.f32.gmra.mxu0 %v588
    %v634 = vpop.f32.mrf.mxu0
    %v635 = vadd.f32 0.0, %v634
    %636 = vdwg.mxu0
    %637 = vmatpush.msra.mxu0 %v455
    %638 = vmatpush.msra.mxu0 %v451
    %639 = vmatpush.msra.mxu0 %v447
    %640 = vmatpush.msra.mxu0 %v443
    %641 = vmatpush.msra.mxu0 %v439
    %642 = vmatpush.msra.mxu0 %v435
    %643 = vmatpush.msra.mxu0 %v431
    %644 = vmatpush.msra.mxu0 %v427
    %645 = vmatpush.msra.mxu0 %v423
    %646 = vmatpush.msra.mxu0 %v419
    %647 = vmatpush.msra.mxu0 %v415
    %648 = vmatpush.msra.mxu0 %v411
    %649 = vmatpush.msra.mxu0 %v407
    %650 = vmatpush.msra.mxu0 %v403
    %651 = vmatpush.msra.mxu0 %v399
    %652 = vmatpush.msra.mxu0 %v395
    %653 = vmatmul.f32.gmra.mxu0 %v588
    %v654 = vpop.f32.mrf.mxu0
    %v655 = vadd.f32 0.0, %v654
    %656 = vdwg.mxu0
    %657 = vmatpush.msra.mxu0 %v456
    %658 = vmatpush.msra.mxu0 %v452
    %659 = vmatpush.msra.mxu0 %v448
    %660 = vmatpush.msra.mxu0 %v444
    %661 = vmatpush.msra.mxu0 %v440
    %662 = vmatpush.msra.mxu0 %v436
    %663 = vmatpush.msra.mxu0 %v432
    %664 = vmatpush.msra.mxu0 %v428
    %665 = vmatpush.msra.mxu0 %v424
    %666 = vmatpush.msra.mxu0 %v420
    %667 = vmatpush.msra.mxu0 %v416
    %668 = vmatpush.msra.mxu0 %v412
    %669 = vmatpush.msra.mxu0 %v408
    %670 = vmatpush.msra.mxu0 %v404
    %671 = vmatpush.msra.mxu0 %v400
    %672 = vmatpush.msra.mxu0 %v396
    %673 = vmatmul.f32.gmra.mxu0 %v588
    %v674 = vpop.f32.mrf.mxu0
    %v675 = vadd.f32 0.0, %v674
    %676 = vdwg.mxu0
    %677 = vmatpush.msra.mxu0 %v457
    %678 = vmatpush.msra.mxu0 %v453
    %679 = vmatpush.msra.mxu0 %v449
    %680 = vmatpush.msra.mxu0 %v445
    %681 = vmatpush.msra.mxu0 %v441
    %682 = vmatpush.msra.mxu0 %v437
    %683 = vmatpush.msra.mxu0 %v433
    %684 = vmatpush.msra.mxu0 %v429
    %685 = vmatpush.msra.mxu0 %v425
    %686 = vmatpush.msra.mxu0 %v421
    %687 = vmatpush.msra.mxu0 %v417
    %688 = vmatpush.msra.mxu0 %v413
    %689 = vmatpush.msra.mxu0 %v409
    %690 = vmatpush.msra.mxu0 %v405
    %691 = vmatpush.msra.mxu0 %v401
    %692 = vmatpush.msra.mxu0 %v397
    %693 = vmatmul.f32.gmra.mxu0 %v588
    %v694 = vpop.f32.mrf.mxu0
    %v695 = vadd.f32 0.0, %v694
    %696 = vdwg.mxu0
    %v697 = vadd.f32 %v613, %v635
    %v698 = vadd.f32 %v614, %v655
    %v699 = vadd.f32 %v615, %v675
    %v700 = vadd.f32 %v616, %v695
    %v701 = vmul.f32 %v697, 0.5
    %v702 = vtanh.pop %v701
    %v703 = vadd.f32 %v702, 1.0
    %v704 = vmul.f32 %v703, 0.5
    %v705 = vmul.f32 %v698, 0.5
    %v706 = vtanh.pop %v705
    %v707 = vadd.f32 %v706, 1.0
    %v708 = vmul.f32 %v707, 0.5
    %v709 = vtanh.pop %v699
    %v710 = vmul.f32 %v700, 0.5
    %v711 = vtanh.pop %v710
    %v712 = vadd.f32 %v711, 1.0
    %v713 = vmul.f32 %v712, 0.5
    %v714 = vmul.f32 %v708, %v586
    %v715 = vmul.f32 %v704, %v709
    %v716 = vadd.f32 %v714, %v715
    %v717 = vtanh.pop %v716
    %v718 = vmul.f32 %v713, %v717
    %719 = vmatpush.msra.mxu0 %v473
    %720 = vmatpush.msra.mxu0 %v472
    %721 = vmatpush.msra.mxu0 %v471
    %722 = vmatpush.msra.mxu0 %v470
    %723 = vmatpush.msra.mxu0 %v469
    %724 = vmatpush.msra.mxu0 %v468
    %725 = vmatpush.msra.mxu0 %v467
    %726 = vmatpush.msra.mxu0 %v466
    %727 = vmatpush.msra.mxu0 %v465
    %728 = vmatpush.msra.mxu0 %v464
    %729 = vmatpush.msra.mxu0 %v463
    %730 = vmatpush.msra.mxu0 %v462
    %731 = vmatpush.msra.mxu0 %v461
    %732 = vmatpush.msra.mxu0 %v460
    %733 = vmatpush.msra.mxu0 %v459
    %734 = vmatpush.msra.mxu0 %v458
    %735 = vmatmul.f32.gmra.mxu0 %v718
    %v736 = vpop.f32.mrf.mxu0
    %v737 = vadd.f32 %v476, %v736
    %738 = vdwg.mxu0
    %s739 = scalar_lea.vmem %s7, 8
    %740 = vst [vmem:[%s739] sm:$0xff] %v737
    %s741 = smul.u32 2, 4
    %s742 = smul.addr %s741, 8
    %s743 = scalar_lea.vmem [#allocation2], %s742
    %v744 = vld [vmem:[%s743] sm:$0xff]
    %v745 = vld [vmem:[%s743 + $0x8] sm:$0xff]
    %v746 = vld [vmem:[%s743 + $0x10] sm:$0xff]
    %v747 = vld [vmem:[%s743 + $0x18] sm:$0xff]
    %748 = vmatpush.msra.mxu0 %v454
    %749 = vmatpush.msra.mxu0 %v450
    %750 = vmatpush.msra.mxu0 %v446
    %751 = vmatpush.msra.mxu0 %v442
    %752 = vmatpush.msra.mxu0 %v438
    %753 = vmatpush.msra.mxu0 %v434
    %754 = vmatpush.msra.mxu0 %v430
    %755 = vmatpush.msra.mxu0 %v426
    %756 = vmatpush.msra.mxu0 %v422
    %757 = vmatpush.msra.mxu0 %v418
    %758 = vmatpush.msra.mxu0 %v414
    %759 = vmatpush.msra.mxu0 %v410
    %760 = vmatpush.msra.mxu0 %v406
    %761 = vmatpush.msra.mxu0 %v402
    %762 = vmatpush.msra.mxu0 %v398
    %763 = vmatpush.msra.mxu0 %v394
    %764 = vmatmul.f32.gmra.mxu0 %v718
    %v765 = vpop.f32.mrf.mxu0
    %v766 = vadd.f32 0.0, %v765
    %767 = vdwg.mxu0
    %768 = vmatpush.msra.mxu0 %v455
    %769 = vmatpush.msra.mxu0 %v451
    %770 = vmatpush.msra.mxu0 %v447
    %771 = vmatpush.msra.mxu0 %v443
    %772 = vmatpush.msra.mxu0 %v439
    %773 = vmatpush.msra.mxu0 %v435
    %774 = vmatpush.msra.mxu0 %v431
    %775 = vmatpush.msra.mxu0 %v427
    %776 = vmatpush.msra.mxu0 %v423
    %777 = vmatpush.msra.mxu0 %v419
    %778 = vmatpush.msra.mxu0 %v415
    %779 = vmatpush.msra.mxu0 %v411
    %780 = vmatpush.msra.mxu0 %v407
    %781 = vmatpush.msra.mxu0 %v403
    %782 = vmatpush.msra.mxu0 %v399
    %783 = vmatpush.msra.mxu0 %v395
    %784 = vmatmul.f32.gmra.mxu0 %v718
    %v785 = vpop.f32.mrf.mxu0
    %v786 = vadd.f32 0.0, %v785
    %787 = vdwg.mxu0
    %788 = vmatpush.msra.mxu0 %v456
    %789 = vmatpush.msra.mxu0 %v452
    %790 = vmatpush.msra.mxu0 %v448
    %791 = vmatpush.msra.mxu0 %v444
    %792 = vmatpush.msra.mxu0 %v440
    %793 = vmatpush.msra.mxu0 %v436
    %794 = vmatpush.msra.mxu0 %v432
    %795 = vmatpush.msra.mxu0 %v428
    %796 = vmatpush.msra.mxu0 %v424
    %797 = vmatpush.msra.mxu0 %v420
    %798 = vmatpush.msra.mxu0 %v416
    %799 = vmatpush.msra.mxu0 %v412
    %800 = vmatpush.msra.mxu0 %v408
    %801 = vmatpush.msra.mxu0 %v404
    %802 = vmatpush.msra.mxu0 %v400
    %803 = vmatpush.msra.mxu0 %v396
    %804 = vmatmul.f32.gmra.mxu0 %v718
    %v805 = vpop.f32.mrf.mxu0
    %v806 = vadd.f32 0.0, %v805
    %807 = vdwg.mxu0
    %808 = vmatpush.msra.mxu0 %v457
    %809 = vmatpush.msra.mxu0 %v453
    %810 = vmatpush.msra.mxu0 %v449
    %811 = vmatpush.msra.mxu0 %v445
    %812 = vmatpush.msra.mxu0 %v441
    %813 = vmatpush.msra.mxu0 %v437
    %814 = vmatpush.msra.mxu0 %v433
    %815 = vmatpush.msra.mxu0 %v429
    %816 = vmatpush.msra.mxu0 %v425
    %817 = vmatpush.msra.mxu0 %v421
    %818 = vmatpush.msra.mxu0 %v417
    %819 = vmatpush.msra.mxu0 %v413
    %820 = vmatpush.msra.mxu0 %v409
    %821 = vmatpush.msra.mxu0 %v405
    %822 = vmatpush.msra.mxu0 %v401
    %823 = vmatpush.msra.mxu0 %v397
    %824 = vmatmul.f32.gmra.mxu0 %v718
    %v825 = vpop.f32.mrf.mxu0
    %v826 = vadd.f32 0.0, %v825
    %827 = vdwg.mxu0
    %v828 = vadd.f32 %v744, %v766
    %v829 = vadd.f32 %v745, %v786
    %v830 = vadd.f32 %v746, %v806
    %v831 = vadd.f32 %v747, %v826
    %v832 = vmul.f32 %v828, 0.5
    %v833 = vtanh.pop %v832
    %v834 = vadd.f32 %v833, 1.0
    %v835 = vmul.f32 %v834, 0.5
    %v836 = vmul.f32 %v829, 0.5
    %v837 = vtanh.pop %v836
    %v838 = vadd.f32 %v837, 1.0
    %v839 = vmul.f32 %v838, 0.5
    %v840 = vtanh.pop %v830
    %v841 = vmul.f32 %v831, 0.5
    %v842 = vtanh.pop %v841
    %v843 = vadd.f32 %v842, 1.0
    %v844 = vmul.f32 %v843, 0.5
    %v845 = vmul.f32 %v839, %v716
    %v846 = vmul.f32 %v835, %v840
    %v847 = vadd.f32 %v845, %v846
    %v848 = vtanh.pop %v847
    %v849 = vmul.f32 %v844, %v848
    %850 = vmatpush.msra.mxu0 %v473
    %851 = vmatpush.msra.mxu0 %v472
    %852 = vmatpush.msra.mxu0 %v471
    %853 = vmatpush.msra.mxu0 %v470
    %854 = vmatpush.msra.mxu0 %v469
    %855 = vmatpush.msra.mxu0 %v468
    %856 = vmatpush.msra.mxu0 %v467
    %857 = vmatpush.msra.mxu0 %v466
    %858 = vmatpush.msra.mxu0 %v465
    %859 = vmatpush.msra.mxu0 %v464
    %860 = vmatpush.msra.mxu0 %v463
    %861 = vmatpush.msra.mxu0 %v462
    %862 = vmatpush.msra.mxu0 %v461
    %863 = vmatpush.msra.mxu0 %v460
    %864 = vmatpush.msra.mxu0 %v459
    %865 = vmatpush.msra.mxu0 %v458
    %866 = vmatmul.f32.gmra.mxu0 %v849
    %v867 = vpop.f32.mrf.mxu0
    %v868 = vadd.f32 %v476, %v867
    %869 = vdwg.mxu0
    %s870 = scalar_lea.vmem %s7, 16
    %871 = vst [vmem:[%s870] sm:$0xff] %v868
    %s872 = smul.u32 3, 4
    %s873 = smul.addr %s872, 8
    %s874 = scalar_lea.vmem [#allocation2], %s873
    %v875 = vld [vmem:[%s874] sm:$0xff]
    %v876 = vld [vmem:[%s874 + $0x8] sm:$0xff]
    %v877 = vld [vmem:[%s874 + $0x10] sm:$0xff]
    %v878 = vld [vmem:[%s874 + $0x18] sm:$0xff]
    %879 = vmatpush.msra.mxu0 %v454
    %880 = vmatpush.msra.mxu0 %v450
    %881 = vmatpush.msra.mxu0 %v446
    %882 = vmatpush.msra.mxu0 %v442
    %883 = vmatpush.msra.mxu0 %v438
    %884 = vmatpush.msra.mxu0 %v434
    %885 = vmatpush.msra.mxu0 %v430
    %886 = vmatpush.msra.mxu0 %v426
    %887 = vmatpush.msra.mxu0 %v422
    %888 = vmatpush.msra.mxu0 %v418
    %889 = vmatpush.msra.mxu0 %v414
    %890 = vmatpush.msra.mxu0 %v410
    %891 = vmatpush.msra.mxu0 %v406
    %892 = vmatpush.msra.mxu0 %v402
    %893 = vmatpush.msra.mxu0 %v398
    %894 = vmatpush.msra.mxu0 %v394
    %895 = vmatmul.f32.gmra.mxu0 %v849
    %v896 = vpop.f32.mrf.mxu0
    %v897 = vadd.f32 0.0, %v896
    %898 = vdwg.mxu0
    %899 = vmatpush.msra.mxu0 %v455
    %900 = vmatpush.msra.mxu0 %v451
    %901 = vmatpush.msra.mxu0 %v447
    %902 = vmatpush.msra.mxu0 %v443
    %903 = vmatpush.msra.mxu0 %v439
    %904 = vmatpush.msra.mxu0 %v435
    %905 = vmatpush.msra.mxu0 %v431
    %906 = vmatpush.msra.mxu0 %v427
    %907 = vmatpush.msra.mxu0 %v423
    %908 = vmatpush.msra.mxu0 %v419
    %909 = vmatpush.msra.mxu0 %v415
    %910 = vmatpush.msra.mxu0 %v411
    %911 = vmatpush.msra.mxu0 %v407
    %912 = vmatpush.msra.mxu0 %v403
    %913 = vmatpush.msra.mxu0 %v399
    %914 = vmatpush.msra.mxu0 %v395
    %915 = vmatmul.f32.gmra.mxu0 %v849
    %v916 = vpop.f32.mrf.mxu0
    %v917 = vadd.f32 0.0, %v916
    %918 = vdwg.mxu0
    %919 = vmatpush.msra.mxu0 %v456
    %920 = vmatpush.msra.mxu0 %v452
    %921 = vmatpush.msra.mxu0 %v448
    %922 = vmatpush.msra.mxu0 %v444
    %923 = vmatpush.msra.mxu0 %v440
    %924 = vmatpush.msra.mxu0 %v436
    %925 = vmatpush.msra.mxu0 %v432
    %926 = vmatpush.msra.mxu0 %v428
    %927 = vmatpush.msra.mxu0 %v424
    %928 = vmatpush.msra.mxu0 %v420
    %929 = vmatpush.msra.mxu0 %v416
    %930 = vmatpush.msra.mxu0 %v412
    %931 = vmatpush.msra.mxu0 %v408
    %932 = vmatpush.msra.mxu0 %v404
    %933 = vmatpush.msra.mxu0 %v400
    %934 = vmatpush.msra.mxu0 %v396
    %935 = vmatmul.f32.gmra.mxu0 %v849
    %v936 = vpop.f32.mrf.mxu0
    %v937 = vadd.f32 0.0, %v936
    %938 = vdwg.mxu0
    %939 = vmatpush.msra.mxu0 %v457
    %940 = vmatpush.msra.mxu0 %v453
    %941 = vmatpush.msra.mxu0 %v449
    %942 = vmatpush.msra.mxu0 %v445
    %943 = vmatpush.msra.mxu0 %v441
    %944 = vmatpush.msra.mxu0 %v437
    %945 = vmatpush.msra.mxu0 %v433
    %946 = vmatpush.msra.mxu0 %v429
    %947 = vmatpush.msra.mxu0 %v425
    %948 = vmatpush.msra.mxu0 %v421
    %949 = vmatpush.msra.mxu0 %v417
    %950 = vmatpush.msra.mxu0 %v413
    %951 = vmatpush.msra.mxu0 %v409
    %952 = vmatpush.msra.mxu0 %v405
    %953 = vmatpush.msra.mxu0 %v401
    %954 = vmatpush.msra.mxu0 %v397
    %955 = vmatmul.f32.gmra.mxu0 %v849
    %v956 = vpop.f32.mrf.mxu0
    %v957 = vadd.f32 0.0, %v956
    %958 = vdwg.mxu0
    %v959 = vadd.f32 %v875, %v897
    %v960 = vadd.f32 %v876, %v917
    %v961 = vadd.f32 %v877, %v937
    %v962 = vadd.f32 %v878, %v957
    %v963 = vmul.f32 %v959, 0.5
    %v964 = vtanh.pop %v963
    %v965 = vadd.f32 %v964, 1.0
    %v966 = vmul.f32 %v965, 0.5
    %v967 = vmul.f32 %v960, 0.5
    %v968 = vtanh.pop %v967
    %v969 = vadd.f32 %v968, 1.0
    %v970 = vmul.f32 %v969, 0.5
    %v971 = vtanh.pop %v961
    %v972 = vmul.f32 %v962, 0.5
    %v973 = vtanh.pop %v972
    %v974 = vadd.f32 %v973, 1.0
    %v975 = vmul.f32 %v974, 0.5
    %v976 = vmul.f32 %v970, %v847
    %v977 = vmul.f32 %v966, %v971
    %v978 = vadd.f32 %v976, %v977
    %v979 = vtanh.pop %v978
    %v980 = vmul.f32 %v975, %v979
    %981 = vmatpush.msra.mxu0 %v473
    %982 = vmatpush.msra.mxu0 %v472
    %983 = vmatpush.msra.mxu0 %v471
    %984 = vmatpush.msra.mxu0 %v470
    %985 = vmatpush.msra.mxu0 %v469
    %986 = vmatpush.msra.mxu0 %v468
    %987 = vmatpush.msra.mxu0 %v467
    %988 = vmatpush.msra.mxu0 %v466
    %989 = vmatpush.msra.mxu0 %v465
    %990 = vmatpush.msra.mxu0 %v464
    %991 = vmatpush.msra.mxu0 %v463
    %992 = vmatpush.msra.mxu0 %v462
    %993 = vmatpush.msra.mxu0 %v461
    %994 = vmatpush.msra.mxu0 %v460
    %995 = vmatpush.msra.mxu0 %v459
    %996 = vmatpush.msra.mxu0 %v458
    %997 = vmatmul.f32.gmra.mxu0 %v980
    %v998 = vpop.f32.mrf.mxu0
    %v999 = vadd.f32 %v476, %v998
    %1000 = vdwg.mxu0
    %s1001 = scalar_lea.vmem %s7, 24
    %1002 = vst [vmem:[%s1001] sm:$0xff] %v999
    %s1003 = smul.u32 4, 4
    %s1004 = smul.addr %s1003, 8
    %s1005 = scalar_lea.vmem [#allocation2], %s1004
    %v1006 = vld [vmem:[%s1005] sm:$0xff]
    %v1007 = vld [vmem:[%s1005 + $0x8] sm:$0xff]
    %v1008 = vld [vmem:[%s1005 + $0x10] sm:$0xff]
    %v1009 = vld [vmem:[%s1005 + $0x18] sm:$0xff]
    %1010 = vmatpush.msra.mxu0 %v454
    %1011 = vmatpush.msra.mxu0 %v450
    %1012 = vmatpush.msra.mxu0 %v446
    %1013 = vmatpush.msra.mxu0 %v442
    %1014 = vmatpush.msra.mxu0 %v438
    %1015 = vmatpush.msra.mxu0 %v434
    %1016 = vmatpush.msra.mxu0 %v430
    %1017 = vmatpush.msra.mxu0 %v426
    %1018 = vmatpush.msra.mxu0 %v422
    %1019 = vmatpush.msra.mxu0 %v418
    %1020 = vmatpush.msra.mxu0 %v414
    %1021 = vmatpush.msra.mxu0 %v410
    %1022 = vmatpush.msra.mxu0 %v406
    %1023 = vmatpush.msra.mxu0 %v402
    %1024 = vmatpush.msra.mxu0 %v398
    %1025 = vmatpush.msra.mxu0 %v394
    %1026 = vmatmul.f32.gmra.mxu0 %v980
    %v1027 = vpop.f32.mrf.mxu0
    %v1028 = vadd.f32 0.0, %v1027
    %1029 = vdwg.mxu0
    %1030 = vmatpush.msra.mxu0 %v455
    %1031 = vmatpush.msra.mxu0 %v451
    %1032 = vmatpush.msra.mxu0 %v447
    %1033 = vmatpush.msra.mxu0 %v443
    %1034 = vmatpush.msra.mxu0 %v439
    %1035 = vmatpush.msra.mxu0 %v435
    %1036 = vmatpush.msra.mxu0 %v431
    %1037 = vmatpush.msra.mxu0 %v427
    %1038 = vmatpush.msra.mxu0 %v423
    %1039 = vmatpush.msra.mxu0 %v419
    %1040 = vmatpush.msra.mxu0 %v415
    %1041 = vmatpush.msra.mxu0 %v411
    %1042 = vmatpush.msra.mxu0 %v407
    %1043 = vmatpush.msra.mxu0 %v403
    %1044 = vmatpush.msra.mxu0 %v399
    %1045 = vmatpush.msra.mxu0 %v395
    %1046 = vmatmul.f32.gmra.mxu0 %v980
    %v1047 = vpop.f32.mrf.mxu0
    %v1048 = vadd.f32 0.0, %v1047
    %1049 = vdwg.mxu0
    %1050 = vmatpush.msra.mxu0 %v456
    %1051 = vmatpush.msra.mxu0 %v452
    %1052 = vmatpush.msra.mxu0 %v448
    %1053 = vmatpush.msra.mxu0 %v444
    %1054 = vmatpush.msra.mxu0 %v440
    %1055 = vmatpush.msra.mxu0 %v436
    %1056 = vmatpush.msra.mxu0 %v432
    %1057 = vmatpush.msra.mxu0 %v428
    %1058 = vmatpush.msra.mxu0 %v424
    %1059 = vmatpush.msra.mxu0 %v420
    %1060 = vmatpush.msra.mxu0 %v416
    %1061 = vmatpush.msra.mxu0 %v412
    %1062 = vmatpush.msra.mxu0 %v408
    %1063 = vmatpush.msra.mxu0 %v404
    %1064 = vmatpush.msra.mxu0 %v400
    %1065 = vmatpush.msra.mxu0 %v396
    %1066 = vmatmul.f32.gmra.mxu0 %v980
    %v1067 = vpop.f32.mrf.mxu0
    %v1068 = vadd.f32 0.0, %v1067
    %1069 = vdwg.mxu0
    %1070 = vmatpush.msra.mxu0 %v457
    %1071 = vmatpush.msra.mxu0 %v453
    %1072 = vmatpush.msra.mxu0 %v449
    %1073 = vmatpush.msra.mxu0 %v445
    %1074 = vmatpush.msra.mxu0 %v441
    %1075 = vmatpush.msra.mxu0 %v437
    %1076 = vmatpush.msra.mxu0 %v433
    %1077 = vmatpush.msra.mxu0 %v429
    %1078 = vmatpush.msra.mxu0 %v425
    %1079 = vmatpush.msra.mxu0 %v421
    %1080 = vmatpush.msra.mxu0 %v417
    %1081 = vmatpush.msra.mxu0 %v413
    %1082 = vmatpush.msra.mxu0 %v409
    %1083 = vmatpush.msra.mxu0 %v405
    %1084 = vmatpush.msra.mxu0 %v401
    %1085 = vmatpush.msra.mxu0 %v397
    %1086 = vmatmul.f32.gmra.mxu0 %v980
    %v1087 = vpop.f32.mrf.mxu0
    %v1088 = vadd.f32 0.0, %v1087
    %1089 = vdwg.mxu0
    %v1090 = vadd.f32 %v1006, %v1028
    %v1091 = vadd.f32 %v1007, %v1048
    %v1092 = vadd.f32 %v1008, %v1068
    %v1093 = vadd.f32 %v1009, %v1088
    %v1094 = vmul.f32 %v1090, 0.5
    %v1095 = vtanh.pop %v1094
    %v1096 = vadd.f32 %v1095, 1.0
    %v1097 = vmul.f32 %v1096, 0.5
    %v1098 = vmul.f32 %v1091, 0.5
    %v1099 = vtanh.pop %v1098
    %v1100 = vadd.f32 %v1099, 1.0
    %v1101 = vmul.f32 %v1100, 0.5
    %v1102 = vtanh.pop %v1092
    %v1103 = vmul.f32 %v1093, 0.5
    %v1104 = vtanh.pop %v1103
    %v1105 = vadd.f32 %v1104, 1.0
    %v1106 = vmul.f32 %v1105, 0.5
    %v1107 = vmul.f32 %v1101, %v978
    %v1108 = vmul.f32 %v1097, %v1102
    %v1109 = vadd.f32 %v1107, %v1108
    %v1110 = vtanh.pop %v1109
    %v1111 = vmul.f32 %v1106, %v1110
    %1112 = vmatpush.msra.mxu0 %v473
    %1113 = vmatpush.msra.mxu0 %v472
    %1114 = vmatpush.msra.mxu0 %v471
    %1115 = vmatpush.msra.mxu0 %v470
    %1116 = vmatpush.msra.mxu0 %v469
    %1117 = vmatpush.msra.mxu0 %v468
    %1118 = vmatpush.msra.mxu0 %v467
    %1119 = vmatpush.msra.mxu0 %v466
    %1120 = vmatpush.msra.mxu0 %v465
    %1121 = vmatpush.msra.mxu0 %v464
    %1122 = vmatpush.msra.mxu0 %v463
    %1123 = vmatpush.msra.mxu0 %v462
    %1124 = vmatpush.msra.mxu0 %v461
    %1125 = vmatpush.msra.mxu0 %v460
    %1126 = vmatpush.msra.mxu0 %v459
    %1127 = vmatpush.msra.mxu0 %v458
    %1128 = vmatmul.f32.gmra.mxu0 %v1111
    %v1129 = vpop.f32.mrf.mxu0
    %v1130 = vadd.f32 %v476, %v1129
    %1131 = vdwg.mxu0
    %s1132 = scalar_lea.vmem %s7, 32
    %1133 = vst [vmem:[%s1132] sm:$0xff] %v1130
    %s1134 = smul.u32 5, 4
    %s1135 = smul.addr %s1134, 8
    %s1136 = scalar_lea.vmem [#allocation2], %s1135
    %v1137 = vld [vmem:[%s1136] sm:$0xff]
    %v1138 = vld [vmem:[%s1136 + $0x8] sm:$0xff]
    %v1139 = vld [vmem:[%s1136 + $0x10] sm:$0xff]
    %v1140 = vld [vmem:[%s1136 + $0x18] sm:$0xff]
    %1141 = vmatpush.msra.mxu0 %v454
    %1142 = vmatpush.msra.mxu0 %v450
    %1143 = vmatpush.msra.mxu0 %v446
    %1144 = vmatpush.msra.mxu0 %v442
    %1145 = vmatpush.msra.mxu0 %v438
    %1146 = vmatpush.msra.mxu0 %v434
    %1147 = vmatpush.msra.mxu0 %v430
    %1148 = vmatpush.msra.mxu0 %v426
    %1149 = vmatpush.msra.mxu0 %v422
    %1150 = vmatpush.msra.mxu0 %v418
    %1151 = vmatpush.msra.mxu0 %v414
    %1152 = vmatpush.msra.mxu0 %v410
    %1153 = vmatpush.msra.mxu0 %v406
    %1154 = vmatpush.msra.mxu0 %v402
    %1155 = vmatpush.msra.mxu0 %v398
    %1156 = vmatpush.msra.mxu0 %v394
    %1157 = vmatmul.f32.gmra.mxu0 %v1111
    %v1158 = vpop.f32.mrf.mxu0
    %v1159 = vadd.f32 0.0, %v1158
    %1160 = vdwg.mxu0
    %1161 = vmatpush.msra.mxu0 %v455
    %1162 = vmatpush.msra.mxu0 %v451
    %1163 = vmatpush.msra.mxu0 %v447
    %1164 = vmatpush.msra.mxu0 %v443
    %1165 = vmatpush.msra.mxu0 %v439
    %1166 = vmatpush.msra.mxu0 %v435
    %1167 = vmatpush.msra.mxu0 %v431
    %1168 = vmatpush.msra.mxu0 %v427
    %1169 = vmatpush.msra.mxu0 %v423
    %1170 = vmatpush.msra.mxu0 %v419
    %1171 = vmatpush.msra.mxu0 %v415
    %1172 = vmatpush.msra.mxu0 %v411
    %1173 = vmatpush.msra.mxu0 %v407
    %1174 = vmatpush.msra.mxu0 %v403
    %1175 = vmatpush.msra.mxu0 %v399
    %1176 = vmatpush.msra.mxu0 %v395
    %1177 = vmatmul.f32.gmra.mxu0 %v1111
    %v1178 = vpop.f32.mrf.mxu0
    %v1179 = vadd.f32 0.0, %v1178
    %1180 = vdwg.mxu0
    %1181 = vmatpush.msra.mxu0 %v456
    %1182 = vmatpush.msra.mxu0 %v452
    %1183 = vmatpush.msra.mxu0 %v448
    %1184 = vmatpush.msra.mxu0 %v444
    %1185 = vmatpush.msra.mxu0 %v440
    %1186 = vmatpush.msra.mxu0 %v436
    %1187 = vmatpush.msra.mxu0 %v432
    %1188 = vmatpush.msra.mxu0 %v428
    %1189 = vmatpush.msra.mxu0 %v424
    %1190 = vmatpush.msra.mxu0 %v420
    %1191 = vmatpush.msra.mxu0 %v416
    %1192 = vmatpush.msra.mxu0 %v412
    %1193 = vmatpush.msra.mxu0 %v408
    %1194 = vmatpush.msra.mxu0 %v404
    %1195 = vmatpush.msra.mxu0 %v400
    %1196 = vmatpush.msra.mxu0 %v396
    %1197 = vmatmul.f32.gmra.mxu0 %v1111
    %v1198 = vpop.f32.mrf.mxu0
    %v1199 = vadd.f32 0.0, %v1198
    %1200 = vdwg.mxu0
    %1201 = vmatpush.msra.mxu0 %v457
    %1202 = vmatpush.msra.mxu0 %v453
    %1203 = vmatpush.msra.mxu0 %v449
    %1204 = vmatpush.msra.mxu0 %v445
    %1205 = vmatpush.msra.mxu0 %v441
    %1206 = vmatpush.msra.mxu0 %v437
    %1207 = vmatpush.msra.mxu0 %v433
    %1208 = vmatpush.msra.mxu0 %v429
    %1209 = vmatpush.msra.mxu0 %v425
    %1210 = vmatpush.msra.mxu0 %v421
    %1211 = vmatpush.msra.mxu0 %v417
    %1212 = vmatpush.msra.mxu0 %v413
    %1213 = vmatpush.msra.mxu0 %v409
    %1214 = vmatpush.msra.mxu0 %v405
    %1215 = vmatpush.msra.mxu0 %v401
    %1216 = vmatpush.msra.mxu0 %v397
    %1217 = vmatmul.f32.gmra.mxu0 %v1111
    %v1218 = vpop.f32.mrf.mxu0
    %v1219 = vadd.f32 0.0, %v1218
    %1220 = vdwg.mxu0
    %v1221 = vadd.f32 %v1137, %v1159
    %v1222 = vadd.f32 %v1138, %v1179
    %v1223 = vadd.f32 %v1139, %v1199
    %v1224 = vadd.f32 %v1140, %v1219
    %v1225 = vmul.f32 %v1221, 0.5
    %v1226 = vtanh.pop %v1225
    %v1227 = vadd.f32 %v1226, 1.0
    %v1228 = vmul.f32 %v1227, 0.5
    %v1229 = vmul.f32 %v1222, 0.5
    %v1230 = vtanh.pop %v1229
    %v1231 = vadd.f32 %v1230, 1.0
    %v1232 = vmul.f32 %v1231, 0.5
    %v1233 = vtanh.pop %v1223
    %v1234 = vmul.f32 %v1224, 0.5
    %v1235 = vtanh.pop %v1234
    %v1236 = vadd.f32 %v1235, 1.0
    %v1237 = vmul.f32 %v1236, 0.5
    %v1238 = vmul.f32 %v1232, %v1109
    %v1239 = vmul.f32 %v1228, %v1233
    %v1240 = vadd.f32 %v1238, %v1239
    %v1241 = vtanh.pop %v1240
    %v1242 = vmul.f32 %v1237, %v1241
    %1243 = vmatpush.msra.mxu0 %v473
    %1244 = vmatpush.msra.mxu0 %v472
    %1245 = vmatpush.msra.mxu0 %v471
    %1246 = vmatpush.msra.mxu0 %v470
    %1247 = vmatpush.msra.mxu0 %v469
    %1248 = vmatpush.msra.mxu0 %v468
    %1249 = vmatpush.msra.mxu0 %v467
    %1250 = vmatpush.msra.mxu0 %v466
    %1251 = vmatpush.msra.mxu0 %v465
    %1252 = vmatpush.msra.mxu0 %v464
    %1253 = vmatpush.msra.mxu0 %v463
    %1254 = vmatpush.msra.mxu0 %v462
    %1255 = vmatpush.msra.mxu0 %v461
    %1256 = vmatpush.msra.mxu0 %v460
    %1257 = vmatpush.msra.mxu0 %v459
    %1258 = vmatpush.msra.mxu0 %v458
    %1259 = vmatmul.f32.gmra.mxu0 %v1242
    %v1260 = vpop.f32.mrf.mxu0
    %v1261 = vadd.f32 %v476, %v1260
    %1262 = vdwg.mxu0
    %s1263 = scalar_lea.vmem %s7, 40
    %1264 = vst [vmem:[%s1263] sm:$0xff] %v1261
    %s1265 = smul.u32 6, 4
    %s1266 = smul.addr %s1265, 8
    %s1267 = scalar_lea.vmem [#allocation2], %s1266
    %v1268 = vld [vmem:[%s1267] sm:$0xff]
    %v1269 = vld [vmem:[%s1267 + $0x8] sm:$0xff]
    %v1270 = vld [vmem:[%s1267 + $0x10] sm:$0xff]
    %v1271 = vld [vmem:[%s1267 + $0x18] sm:$0xff]
    %1272 = vmatpush.msra.mxu0 %v454
    %1273 = vmatpush.msra.mxu0 %v450
    %1274 = vmatpush.msra.mxu0 %v446
    %1275 = vmatpush.msra.mxu0 %v442
    %1276 = vmatpush.msra.mxu0 %v438
    %1277 = vmatpush.msra.mxu0 %v434
    %1278 = vmatpush.msra.mxu0 %v430
    %1279 = vmatpush.msra.mxu0 %v426
    %1280 = vmatpush.msra.mxu0 %v422
    %1281 = vmatpush.msra.mxu0 %v418
    %1282 = vmatpush.msra.mxu0 %v414
    %1283 = vmatpush.msra.mxu0 %v410
    %1284 = vmatpush.msra.mxu0 %v406
    %1285 = vmatpush.msra.mxu0 %v402
    %1286 = vmatpush.msra.mxu0 %v398
    %1287 = vmatpush.msra.mxu0 %v394
    %1288 = vmatmul.f32.gmra.mxu0 %v1242
    %v1289 = vpop.f32.mrf.mxu0
    %v1290 = vadd.f32 0.0, %v1289
    %1291 = vdwg.mxu0
    %1292 = vmatpush.msra.mxu0 %v455
    %1293 = vmatpush.msra.mxu0 %v451
    %1294 = vmatpush.msra.mxu0 %v447
    %1295 = vmatpush.msra.mxu0 %v443
    %1296 = vmatpush.msra.mxu0 %v439
    %1297 = vmatpush.msra.mxu0 %v435
    %1298 = vmatpush.msra.mxu0 %v431
    %1299 = vmatpush.msra.mxu0 %v427
    %1300 = vmatpush.msra.mxu0 %v423
    %1301 = vmatpush.msra.mxu0 %v419
    %1302 = vmatpush.msra.mxu0 %v415
    %1303 = vmatpush.msra.mxu0 %v411
    %1304 = vmatpush.msra.mxu0 %v407
    %1305 = vmatpush.msra.mxu0 %v403
    %1306 = vmatpush.msra.mxu0 %v399
    %1307 = vmatpush.msra.mxu0 %v395
    %1308 = vmatmul.f32.gmra.mxu0 %v1242
    %v1309 = vpop.f32.mrf.mxu0
    %v1310 = vadd.f32 0.0, %v1309
    %1311 = vdwg.mxu0
    %1312 = vmatpush.msra.mxu0 %v456
    %1313 = vmatpush.msra.mxu0 %v452
    %1314 = vmatpush.msra.mxu0 %v448
    %1315 = vmatpush.msra.mxu0 %v444
    %1316 = vmatpush.msra.mxu0 %v440
    %1317 = vmatpush.msra.mxu0 %v436
    %1318 = vmatpush.msra.mxu0 %v432
    %1319 = vmatpush.msra.mxu0 %v428
    %1320 = vmatpush.msra.mxu0 %v424
    %1321 = vmatpush.msra.mxu0 %v420
    %1322 = vmatpush.msra.mxu0 %v416
    %1323 = vmatpush.msra.mxu0 %v412
    %1324 = vmatpush.msra.mxu0 %v408
    %1325 = vmatpush.msra.mxu0 %v404
    %1326 = vmatpush.msra.mxu0 %v400
    %1327 = vmatpush.msra.mxu0 %v396
    %1328 = vmatmul.f32.gmra.mxu0 %v1242
    %v1329 = vpop.f32.mrf.mxu0
    %v1330 = vadd.f32 0.0, %v1329
    %1331 = vdwg.mxu0
    %1332 = vmatpush.msra.mxu0 %v457
    %1333 = vmatpush.msra.mxu0 %v453
    %1334 = vmatpush.msra.mxu0 %v449
    %1335 = vmatpush.msra.mxu0 %v445
    %1336 = vmatpush.msra.mxu0 %v441
    %1337 = vmatpush.msra.mxu0 %v437
    %1338 = vmatpush.msra.mxu0 %v433
    %1339 = vmatpush.msra.mxu0 %v429
    %1340 = vmatpush.msra.mxu0 %v425
    %1341 = vmatpush.msra.mxu0 %v421
    %1342 = vmatpush.msra.mxu0 %v417
    %1343 = vmatpush.msra.mxu0 %v413
    %1344 = vmatpush.msra.mxu0 %v409
    %1345 = vmatpush.msra.mxu0 %v405
    %1346 = vmatpush.msra.mxu0 %v401
    %1347 = vmatpush.msra.mxu0 %v397
    %1348 = vmatmul.f32.gmra.mxu0 %v1242
    %v1349 = vpop.f32.mrf.mxu0
    %v1350 = vadd.f32 0.0, %v1349
    %1351 = vdwg.mxu0
    %v1352 = vadd.f32 %v1268, %v1290
    %v1353 = vadd.f32 %v1269, %v1310
    %v1354 = vadd.f32 %v1270, %v1330
    %v1355 = vadd.f32 %v1271, %v1350
    %v1356 = vmul.f32 %v1352, 0.5
    %v1357 = vtanh.pop %v1356
    %v1358 = vadd.f32 %v1357, 1.0
    %v1359 = vmul.f32 %v1358, 0.5
    %v1360 = vmul.f32 %v1353, 0.5
    %v1361 = vtanh.pop %v1360
    %v1362 = vadd.f32 %v1361, 1.0
    %v1363 = vmul.f32 %v1362, 0.5
    %v1364 = vtanh.pop %v1354
    %v1365 = vmul.f32 %v1355, 0.5
    %v1366 = vtanh.pop %v1365
    %v1367 = vadd.f32 %v1366, 1.0
    %v1368 = vmul.f32 %v1367, 0.5
    %v1369 = vmul.f32 %v1363, %v1240
    %v1370 = vmul.f32 %v1359, %v1364
    %v1371 = vadd.f32 %v1369, %v1370
    %v1372 = vtanh.pop %v1371
    %v1373 = vmul.f32 %v1368, %v1372
    %1374 = vmatpush.msra.mxu0 %v473
    %1375 = vmatpush.msra.mxu0 %v472
    %1376 = vmatpush.msra.mxu0 %v471
    %1377 = vmatpush.msra.mxu0 %v470
    %1378 = vmatpush.msra.mxu0 %v469
    %1379 = vmatpush.msra.mxu0 %v468
    %1380 = vmatpush.msra.mxu0 %v467
    %1381 = vmatpush.msra.mxu0 %v466
    %1382 = vmatpush.msra.mxu0 %v465
    %1383 = vmatpush.msra.mxu0 %v464
    %1384 = vmatpush.msra.mxu0 %v463
    %1385 = vmatpush.msra.mxu0 %v462
    %1386 = vmatpush.msra.mxu0 %v461
    %1387 = vmatpush.msra.mxu0 %v460
    %1388 = vmatpush.msra.mxu0 %v459
    %1389 = vmatpush.msra.mxu0 %v458
    %1390 = vmatmul.f32.gmra.mxu0 %v1373
    %v1391 = vpop.f32.mrf.mxu0
    %v1392 = vadd.f32 %v476, %v1391
    %1393 = vdwg.mxu0
    %s1394 = scalar_lea.vmem %s7, 48
    %1395 = vst [vmem:[%s1394] sm:$0xff] %v1392
    %s1396 = smul.u32 7, 4
    %s1397 = smul.addr %s1396, 8
    %s1398 = scalar_lea.vmem [#allocation2], %s1397
    %v1399 = vld [vmem:[%s1398] sm:$0xff]
    %v1400 = vld [vmem:[%s1398 + $0x8] sm:$0xff]
    %v1401 = vld [vmem:[%s1398 + $0x10] sm:$0xff]
    %v1402 = vld [vmem:[%s1398 + $0x18] sm:$0xff]
    %1403 = vmatpush.msra.mxu0 %v454
    %1404 = vmatpush.msra.mxu0 %v450
    %1405 = vmatpush.msra.mxu0 %v446
    %1406 = vmatpush.msra.mxu0 %v442
    %1407 = vmatpush.msra.mxu0 %v438
    %1408 = vmatpush.msra.mxu0 %v434
    %1409 = vmatpush.msra.mxu0 %v430
    %1410 = vmatpush.msra.mxu0 %v426
    %1411 = vmatpush.msra.mxu0 %v422
    %1412 = vmatpush.msra.mxu0 %v418
    %1413 = vmatpush.msra.mxu0 %v414
    %1414 = vmatpush.msra.mxu0 %v410
    %1415 = vmatpush.msra.mxu0 %v406
    %1416 = vmatpush.msra.mxu0 %v402
    %1417 = vmatpush.msra.mxu0 %v398
    %1418 = vmatpush.msra.mxu0 %v394
    %1419 = vmatmul.f32.gmra.mxu0 %v1373
    %v1420 = vpop.f32.mrf.mxu0
    %v1421 = vadd.f32 0.0, %v1420
    %1422 = vdwg.mxu0
    %1423 = vmatpush.msra.mxu0 %v455
    %1424 = vmatpush.msra.mxu0 %v451
    %1425 = vmatpush.msra.mxu0 %v447
    %1426 = vmatpush.msra.mxu0 %v443
    %1427 = vmatpush.msra.mxu0 %v439
    %1428 = vmatpush.msra.mxu0 %v435
    %1429 = vmatpush.msra.mxu0 %v431
    %1430 = vmatpush.msra.mxu0 %v427
    %1431 = vmatpush.msra.mxu0 %v423
    %1432 = vmatpush.msra.mxu0 %v419
    %1433 = vmatpush.msra.mxu0 %v415
    %1434 = vmatpush.msra.mxu0 %v411
    %1435 = vmatpush.msra.mxu0 %v407
    %1436 = vmatpush.msra.mxu0 %v403
    %1437 = vmatpush.msra.mxu0 %v399
    %1438 = vmatpush.msra.mxu0 %v395
    %1439 = vmatmul.f32.gmra.mxu0 %v1373
    %v1440 = vpop.f32.mrf.mxu0
    %v1441 = vadd.f32 0.0, %v1440
    %1442 = vdwg.mxu0
    %1443 = vmatpush.msra.mxu0 %v456
    %1444 = vmatpush.msra.mxu0 %v452
    %1445 = vmatpush.msra.mxu0 %v448
    %1446 = vmatpush.msra.mxu0 %v444
    %1447 = vmatpush.msra.mxu0 %v440
    %1448 = vmatpush.msra.mxu0 %v436
    %1449 = vmatpush.msra.mxu0 %v432
    %1450 = vmatpush.msra.mxu0 %v428
    %1451 = vmatpush.msra.mxu0 %v424
    %1452 = vmatpush.msra.mxu0 %v420
    %1453 = vmatpush.msra.mxu0 %v416
    %1454 = vmatpush.msra.mxu0 %v412
    %1455 = vmatpush.msra.mxu0 %v408
    %1456 = vmatpush.msra.mxu0 %v404
    %1457 = vmatpush.msra.mxu0 %v400
    %1458 = vmatpush.msra.mxu0 %v396
    %1459 = vmatmul.f32.gmra.mxu0 %v1373
    %v1460 = vpop.f32.mrf.mxu0
    %v1461 = vadd.f32 0.0, %v1460
    %1462 = vdwg.mxu0
    %1463 = vmatpush.msra.mxu0 %v457
    %1464 = vmatpush.msra.mxu0 %v453
    %1465 = vmatpush.msra.mxu0 %v449
    %1466 = vmatpush.msra.mxu0 %v445
    %1467 = vmatpush.msra.mxu0 %v441
    %1468 = vmatpush.msra.mxu0 %v437
    %1469 = vmatpush.msra.mxu0 %v433
    %1470 = vmatpush.msra.mxu0 %v429
    %1471 = vmatpush.msra.mxu0 %v425
    %1472 = vmatpush.msra.mxu0 %v421
    %1473 = vmatpush.msra.mxu0 %v417
    %1474 = vmatpush.msra.mxu0 %v413
    %1475 = vmatpush.msra.mxu0 %v409
    %1476 = vmatpush.msra.mxu0 %v405
    %1477 = vmatpush.msra.mxu0 %v401
    %1478 = vmatpush.msra.mxu0 %v397
    %1479 = vmatmul.f32.gmra.mxu0 %v1373
    %v1480 = vpop.f32.mrf.mxu0
    %v1481 = vadd.f32 0.0, %v1480
    %1482 = vdwg.mxu0
    %v1483 = vadd.f32 %v1399, %v1421
    %v1484 = vadd.f32 %v1400, %v1441
    %v1485 = vadd.f32 %v1401, %v1461
    %v1486 = vadd.f32 %v1402, %v1481
    %v1487 = vmul.f32 %v1483, 0.5
    %v1488 = vtanh.pop %v1487
    %v1489 = vadd.f32 %v1488, 1.0
    %v1490 = vmul.f32 %v1489, 0.5
    %v1491 = vmul.f32 %v1484, 0.5
    %v1492 = vtanh.pop %v1491
    %v1493 = vadd.f32 %v1492, 1.0
    %v1494 = vmul.f32 %v1493, 0.5
    %v1495 = vtanh.pop %v1485
    %v1496 = vmul.f32 %v1486, 0.5
    %v1497 = vtanh.pop %v1496
    %v1498 = vadd.f32 %v1497, 1.0
    %v1499 = vmul.f32 %v1498, 0.5
    %v1500 = vmul.f32 %v1494, %v1371
    %v1501 = vmul.f32 %v1490, %v1495
    %v1502 = vadd.f32 %v1500, %v1501
    %v1503 = vtanh.pop %v1502
    %v1504 = vmul.f32 %v1499, %v1503
    %1505 = vmatpush.msra.mxu0 %v473
    %1506 = vmatpush.msra.mxu0 %v472
    %1507 = vmatpush.msra.mxu0 %v471
    %1508 = vmatpush.msra.mxu0 %v470
    %1509 = vmatpush.msra.mxu0 %v469
    %1510 = vmatpush.msra.mxu0 %v468
    %1511 = vmatpush.msra.mxu0 %v467
    %1512 = vmatpush.msra.mxu0 %v466
    %1513 = vmatpush.msra.mxu0 %v465
    %1514 = vmatpush.msra.mxu0 %v464
    %1515 = vmatpush.msra.mxu0 %v463
    %1516 = vmatpush.msra.mxu0 %v462
    %1517 = vmatpush.msra.mxu0 %v461
    %1518 = vmatpush.msra.mxu0 %v460
    %1519 = vmatpush.msra.mxu0 %v459
    %1520 = vmatpush.msra.mxu0 %v458
    %1521 = vmatmul.f32.gmra.mxu0 %v1504
    %v1522 = vpop.f32.mrf.mxu0
    %v1523 = vadd.f32 %v476, %v1522
    %1524 = vdwg.mxu0
    %s1525 = scalar_lea.vmem %s7, 56
    %1526 = vst [vmem:[%s1525] sm:$0xff] %v1523
    %1527 = vst [vmem:[%s8] sm:$0xff] %v1504
    %1528 = vst [vmem:[%s9] sm:$0xff] %v1502
    // Predicated region
    $region42: #{_char_decoder_impl.1} parent=1 // pred_check
      _
    $region43: #{_char_decoder_impl.1} parent=1 // pred_check_branch
      %1530 = sbr.rel (0) target = $region45
    $region44: #{_char_decoder_impl.1} parent=1 // pred_region
      _
    $region45: #{_char_decoder_impl.1} parent=1 // pred_fallthru
      _
    // Predicated region
    $region46: #{_char_decoder_impl.1} parent=1 // pred_check
      _
    $region47: #{_char_decoder_impl.1} parent=1 // pred_check_branch
      %1532 = sbr.rel (0) target = $region49
    $region48: #{_char_decoder_impl.1} parent=1 // pred_region
      _
    $region49: #{_char_decoder_impl.1} parent=1 // pred_fallthru
      _
    // Predicated region
    $region50: #{_char_decoder_impl.1} parent=1 // pred_check
      _
    $region51: #{_char_decoder_impl.1} parent=1 // pred_check_branch
      %1534 = sbr.rel (0) target = $region53
    $region52: #{_char_decoder_impl.1} parent=1 // pred_region
      _
    $region53: #{_char_decoder_impl.1} parent=1 // pred_fallthru
      _
    // Predicated region
    $region54: #{_char_decoder_impl.1} parent=1 // pred_check
      _
    $region55: #{_char_decoder_impl.1} parent=1 // pred_check_branch
      %1536 = sbr.rel (0) target = $region57
    $region56: #{_char_decoder_impl.1} parent=1 // pred_region
      _
    $region57: #{_char_decoder_impl.1} parent=1 // pred_fallthru
      _
    // Predicated region
    $region58: #{_char_decoder_impl.1} parent=1 // pred_check
      _
    $region59: #{_char_decoder_impl.1} parent=1 // pred_check_branch
      %1538 = sbr.rel (0) target = $region61
    $region60: #{_char_decoder_impl.1} parent=1 // pred_region
      _
    $region61: #{_char_decoder_impl.1} parent=1 // pred_fallthru
      _
    // Predicated region
    $region62: #{_char_decoder_impl.1} parent=1 // pred_check
      _
    $region63: #{_char_decoder_impl.1} parent=1 // pred_check_branch
      %1540 = sbr.rel (0) target = $region65
    $region64: #{_char_decoder_impl.1} parent=1 // pred_region
      _
    $region65: #{_char_decoder_impl.1} parent=1 // pred_fallthru
      _
    %1541 = vsyncpa [#allocation4], 1
    %1542 = vsyncpa [#allocation6], 1

</llo_original>
